<compile_context>
chip_gen: v5e
topology: v5e:2x2
jax: 0.10.0
libtpu: 0.0.40
codegen_flags: <defaults>
</compile_context>

<pallas_src>
import collections
import functools

import jax
import jax.numpy as jnp
from jax.experimental import pallas as pl
from jax.experimental.pallas import tpu as pltpu


def _round_up(x: int, m: int) -> int:
    return (x + m - 1) // m * m


PackedParams = collections.namedtuple(
    "PackedParams", ["wvw", "w1q", "w1n", "b1", "w2", "b2", "f", "fp"])


def prepare_params(params, *, matmul_dtype=None):
    """One-time parameter prep (hoist out of the forward path).

    Pads F to a multiple of 128 (lane-dense, zero pad so padded lanes stay
    numerically inert), concatenates into the few wide matrices the kernel
    consumes, and optionally casts matmul operands to a narrower dtype
    (e.g. jnp.bfloat16 for the v5e MXU).  Accumulation stays f32 in-kernel.
    """
    (wv, ww, w1q, w1n, b1, w2a, w2b, w2c, b2a, b2b, b2c) = params
    f = wv.shape[0]
    fp = _round_up(f, 128)
    dt = matmul_dtype if matmul_dtype is not None else wv.dtype

    def pad_w(w):
        w = w.astype(dt)
        return w if fp == f else jnp.pad(w, ((0, fp - f), (0, fp - f)))

    def pad_b(b):
        b = b.astype(dt).reshape(1, -1)
        return b if fp == f else jnp.pad(b, ((0, 0), (0, fp - f)))

    wvw = jnp.concatenate([pad_w(wv), pad_w(ww)], axis=1)               # [Fp, 2Fp]
    w2 = jnp.concatenate([pad_w(w2a), pad_w(w2b), pad_w(w2c)], axis=1)  # [Fp, 3Fp]
    b2 = jnp.concatenate([pad_b(b2a), pad_b(b2b), pad_b(b2c)], axis=1)  # [1, 3Fp]
    return PackedParams(wvw, pad_w(w1q), pad_w(w1n), pad_b(b1), w2, b2, f, fp)


def _painn_mixing_kernel(
    q_ref, mu_ref,
    wvw_ref, w1q_ref, w1n_ref, b1_ref, w2_ref, b2_ref,
    qo_ref, muo_ref,
    muw_sc,
    *, epsilon: float, f: int,
):
    tn = q_ref.shape[0]
    cdt = wvw_ref.dtype                           # matmul operand dtype (f32 or bf16)

    # ---- mu_channel_mix: per component, one [tn,F]@[F,2F] dot ([Wv|Ww]) -----
    wvw = wvw_ref[...]
    sumsq = jnp.zeros((tn, f), jnp.float32)       # sum_c mu_V_c**2
    dotvw = jnp.zeros((tn, f), jnp.float32)       # sum_c mu_V_c * mu_W_c
    for c in range(3):                            # static unroll, lane-aligned slices
        mu_c = mu_ref[:, c * f:(c + 1) * f].astype(cdt)
        vw = jnp.dot(mu_c, wvw, preferred_element_type=jnp.float32)  # [tn, 2F] f32
        v = vw[:, :f]
        w = vw[:, f:]
        muw_sc[:, c * f:(c + 1) * f] = w.astype(muw_sc.dtype)  # park mu_W in VMEM
        sumsq = sumsq + v * v
        dotvw = dotvw + v * w

    mu_vn = jnp.sqrt(sumsq + epsilon)             # [tn, F] f32

    # ---- intraatomic_context_net layer 1: Dense(2F -> F) + SiLU --------------
    # concat([q, mu_Vn]) @ W1 == q @ W1q + mu_Vn @ W1n
    q_nat = q_ref[...]
    h = (jnp.dot(q_nat.astype(cdt), w1q_ref[...], preferred_element_type=jnp.float32)
         + jnp.dot(mu_vn.astype(cdt), w1n_ref[...], preferred_element_type=jnp.float32)
         + b1_ref[...].astype(jnp.float32))
    h = h * jax.nn.sigmoid(h)                     # SiLU

    # ---- layer 2: Dense(F -> 3F) as ONE wide dot, split at 128-mult lanes ---
    x = (jnp.dot(h.astype(cdt), w2_ref[...], preferred_element_type=jnp.float32)
         + b2_ref[...].astype(jnp.float32))       # [tn, 3F] f32
    dq = x[:, :f]
    dmu_s = x[:, f:2 * f]
    dqmu = x[:, 2 * f:]

    qo_ref[...] = (q_nat.astype(jnp.float32) + dq + dqmu * dotvw).astype(qo_ref.dtype)
    out_dt = muo_ref.dtype
    for c in range(3):
        # single downcast of the f32 delta; add happens in the native mu dtype
        delta = (dmu_s * muw_sc[:, c * f:(c + 1) * f].astype(jnp.float32)).astype(out_dt)
        muo_ref[:, c * f:(c + 1) * f] = mu_ref[:, c * f:(c + 1) * f] + delta


def _vmem_estimate(tile, fp, act_elt, w_elt, scr_elt):
    act = 2 * 2 * (4 * fp) * tile * act_elt       # q + 3*mu blocks, in & out, x2 buffers
    wgt = (7 * fp * fp + 4 * fp) * w_elt          # single-buffered weights + biases
    scr = 3 * fp * tile * scr_elt                 # mu_W VMEM scratch
    tmp = 10 * fp * tile * 4                      # in-kernel f32 temporaries
    return act + wgt + scr + tmp


def painn_mixing(q, mu, params, *, epsilon=1e-8, tile_n=1024,
                 matmul_dtype=None, alias_io=False):
    """q: [N, 1, F], mu: [N, 3, F] -> (q_out [N,1,F], mu_out [N,3,F]).

    `params` may be the raw 11-tuple (prepared on the fly) or a PackedParams
    from prepare_params (preferred: hoists padding/concatenation out of the
    forward path).  Best performance: N a multiple of the tile, F a multiple
    of 128, activations/params in bf16.
    """
    n, one, f = q.shape
    assert one == 1 and mu.shape == (n, 3, f)
    assert tile_n >= 8 and tile_n % 8 == 0

    if not isinstance(params, PackedParams):
        params = prepare_params(params, matmul_dtype=matmul_dtype)
    assert params.f == f
    fp = params.fp

    # ---- tiling: lane-dense features, >=2 grid steps for v7x megacore -------
    n8 = _round_up(n, 8)
    tile = min(tile_n, n8)
    if n8 // tile < 2 and n8 >= 16:
        tile = _round_up((n8 + 1) // 2, 8)        # split so both TCs get work

    # ---- generation-aware VMEM budget (no hard-coded 48 MiB clamp) ----------
    act_elt = q.dtype.itemsize
    w_elt = params.wvw.dtype.itemsize
    scr_elt = w_elt                               # mu_W scratch in matmul dtype
    try:
        phys_vmem = pltpu.get_tpu_info().vmem_capacity_bytes
    except Exception:                              # conservative fallback (v7x-sized)
        phys_vmem = 64 << 20
    cap = max(min(int(phys_vmem * 0.78), phys_vmem - (8 << 20)), 32 << 20)
    while tile > 8 and _vmem_estimate(tile, fp, act_elt, w_elt, scr_elt) + (8 << 20) > cap:
        tile = max(8, (tile // 2) // 8 * 8)
    n_pad = _round_up(n8, tile)

    est = _vmem_estimate(tile, fp, act_elt, w_elt, scr_elt)
    # headroom for the double-buffered-weights fallback path below
    vmem_limit = int(min(max(est + 7 * fp * fp * w_elt + (8 << 20), 32 << 20), cap))

    # ---- pad activations (zero padding is numerically inert) ----------------
    q2d = q.reshape(n, f)
    if n_pad != n or fp != f:
        q2d = jnp.pad(q2d, ((0, n_pad - n), (0, fp - f)))
        mu_p = jnp.pad(mu, ((0, n_pad - n), (0, 0), (0, fp - f)))
    else:
        mu_p = mu
    mu2d = mu_p.reshape(n_pad, 3 * fp)            # free reshape (contiguous)

    grid = (n_pad // tile,)
    const = lambda i: (0, 0)
    q_spec = pl.BlockSpec((tile, fp), lambda i: (i, 0))
    mu_spec = pl.BlockSpec((tile, 3 * fp), lambda i: (i, 0))
    kernel = functools.partial(_painn_mixing_kernel, epsilon=epsilon, f=fp)
    scratch_dtype = params.wvw.dtype

    def run(single_buffer_weights: bool):
        if single_buffer_weights:
            # constant index_map -> DMA'd once; don't reserve a 2nd buffer
            wspec = lambda shape: pl.BlockSpec(shape, const, pipeline_mode=pl.Buffered(1))
        else:
            wspec = lambda shape: pl.BlockSpec(shape, const)
        return pl.pallas_call(
            kernel,
            out_shape=(
                jax.ShapeDtypeStruct((n_pad, fp), q.dtype),
                jax.ShapeDtypeStruct((n_pad, 3 * fp), mu.dtype),
            ),
            grid_spec=pltpu.PrefetchScalarGridSpec(
                num_scalar_prefetch=0,
                grid=grid,
                in_specs=[
                    q_spec, mu_spec,
                    wspec((fp, 2 * fp)),          # [Wv | Ww]
                    wspec((fp, fp)),              # W1q
                    wspec((fp, fp)),              # W1n
                    wspec((1, fp)),               # b1
                    wspec((fp, 3 * fp)),          # [W2a | W2b | W2c]
                    wspec((1, 3 * fp)),           # [b2a | b2b | b2c]
                ],
                out_specs=[q_spec, mu_spec],
                scratch_shapes=[pltpu.VMEM((tile, 3 * fp), scratch_dtype)],
            ),
            compiler_params=pltpu.CompilerParams(
                dimension_semantics=("parallel",),
                vmem_limit_bytes=vmem_limit,
            ),
            input_output_aliases=({0: 0, 1: 1} if alias_io else {}),
        )(q2d, mu2d, params.wvw, params.w1q, params.w1n, params.b1, params.w2, params.b2)

    try:
        q_out, mu_out = run(True)
    except Exception:
        # TODO(synk): fallback for jax versions rejecting pl.Buffered(1) on
        # constant-index BlockSpecs; costs ~7*Fp^2 extra VMEM but is correct.
        q_out, mu_out = run(False)

    q_out = q_out[:n, :f].reshape(n, 1, f)
    mu_out = mu_out.reshape(n_pad, 3, fp)[:n, :, :f]
    return q_out, mu_out


def init_params(key, f, dtype=jnp.float32):
    """Deterministic synthetic parameters, stored in [in, out] layout."""
    ks = jax.random.split(key, 6)
    s = 0.1
    # mu_channel_mix: Dense(F -> 2F), no bias -> split output cols into V / W
    w_mix = jax.random.normal(ks[0], (f, 2 * f), dtype) * s
    wv, ww = w_mix[:, :f], w_mix[:, f:]
    # intraatomic layer 1: Dense(2F -> F) + SiLU; split input rows (q | mu_Vn)
    w1 = jax.random.normal(ks[1], (2 * f, f), dtype) * s
    w1q, w1n = w1[:f, :], w1[f:, :]
    b1 = jax.random.normal(ks[2], (1, f), dtype) * s
    # layer 2: Dense(F -> 3F); split output cols into dq / dmu / dqmu
    w2 = jax.random.normal(ks[3], (f, 3 * f), dtype) * s
    w2a, w2b, w2c = w2[:, :f], w2[:, f:2 * f], w2[:, 2 * f:]
    b2 = jax.random.normal(ks[4], (1, 3 * f), dtype) * s
    b2a, b2b, b2c = b2[:, :f], b2[:, f:2 * f], b2[:, 2 * f:]
    return (wv, ww, w1q, w1n, b1, w2a, w2b, w2c, b2a, b2b, b2c)


def painn_mixing_ref(q, mu, params, epsilon=1e-8):
    """Pure-JAX reference mirroring the PyTorch forward."""
    (wv, ww, w1q, w1n, b1, w2a, w2b, w2c, b2a, b2b, b2c) = params
    mu_v = mu @ wv                                   # [N,3,F]
    mu_w = mu @ ww
    mu_vn = jnp.sqrt(jnp.sum(mu_v ** 2, axis=-2, keepdims=True) + epsilon)  # [N,1,F]
    h = q @ w1q + mu_vn @ w1n + b1[None]             # [N,1,F]
    h = h * jax.nn.sigmoid(h)
    dq = h @ w2a + b2a[None]
    dmu = h @ w2b + b2b[None]
    dqmu = h @ w2c + b2c[None]
    dmu = dmu * mu_w
    dqmu = dqmu * jnp.sum(mu_v * mu_w, axis=1, keepdims=True)
    return q + dq + dqmu, mu + dmu


if __name__ == "__main__":
    key = jax.random.PRNGKey(0)
    # (N, F, tile_n, matmul_dtype, tight_tol)
    configs = [
        (16, 32, 1024, None, 1e-4),    # small F -> lane padding to 128
        (20, 128, 1024, None, 1e-4),   # ragged N -> atom padding, 2-step grid
        (48, 128, 16, None, 1e-4),     # multi-step grid, no padding
        (300, 128, 1024, None, 1e-4),  # auto-split into 2 tiles (v7x megacore)
        (64, 128, 1024, jnp.bfloat16, None),  # bf16 matmul operands (v5e MXU)
    ]
    for (N, F, tn, mm_dt, tol) in configs:
        kq, kmu, kp, key = jax.random.split(key, 4)
        q = jax.random.normal(kq, (N, 1, F), jnp.float32)
        mu = jax.random.normal(kmu, (N, 3, F), jnp.float32)
        raw = init_params(kp, F)
        packed = prepare_params(raw, matmul_dtype=mm_dt)   # hoisted, one-time prep

        q_out, mu_out = painn_mixing(q, mu, packed, tile_n=tn)
        jax.block_until_ready((q_out, mu_out))

        q_ref, mu_ref = painn_mixing_ref(q, mu, raw)
        assert q_out.shape == (N, 1, F) and mu_out.shape == (N, 3, F)
        if tol is None:
            # bf16 matmul operands: scale-relative loose tolerance vs f32 ref
            qa = 0.06 * float(jnp.max(jnp.abs(q_ref))) + 1e-2
            ma = 0.06 * float(jnp.max(jnp.abs(mu_ref))) + 1e-2
            assert jnp.allclose(q_out, q_ref, atol=qa, rtol=0.06), (
                f"q (bf16) mismatch N={N} F={F}: {jnp.max(jnp.abs(q_out - q_ref))}")
            assert jnp.allclose(mu_out, mu_ref, atol=ma, rtol=0.06), (
                f"mu (bf16) mismatch N={N} F={F}: {jnp.max(jnp.abs(mu_out - mu_ref))}")
        else:
            assert jnp.allclose(q_out, q_ref, atol=tol, rtol=tol), (
                f"q mismatch N={N} F={F}: {jnp.max(jnp.abs(q_out - q_ref))}")
            assert jnp.allclose(mu_out, mu_ref, atol=tol, rtol=tol), (
                f"mu mismatch N={N} F={F}: {jnp.max(jnp.abs(mu_out - mu_ref))}")

    print("KERNEL_OK")
</pallas_src>

<mosaic_0001>
module attributes {stable_mosaic.version = 11 : i64} {
  func.func @_painn_mixing_kernel(%arg0: i32, %arg1: memref<8x128xf32, #tpu.memory_space<vmem>>, %arg2: memref<8x384xf32, #tpu.memory_space<vmem>>, %arg3: memref<128x256xf32, #tpu.memory_space<vmem>>, %arg4: memref<128x128xf32, #tpu.memory_space<vmem>>, %arg5: memref<128x128xf32, #tpu.memory_space<vmem>>, %arg6: memref<1x128xf32, #tpu.memory_space<vmem>>, %arg7: memref<128x384xf32, #tpu.memory_space<vmem>>, %arg8: memref<1x384xf32, #tpu.memory_space<vmem>>, %arg9: memref<8x128xf32, #tpu.memory_space<vmem>>, %arg10: memref<8x384xf32, #tpu.memory_space<vmem>>, %arg11: memref<8x384xf32, #tpu.memory_space<vmem>>) attributes {dimension_semantics = [#tpu.dimension_semantics<parallel>], iteration_bounds = array<i64: 2>, scalar_prefetch = 0 : i64, scratch_operands = 1 : i64, tpu.core_type = #tpu.core_type<tc>, window_params = [{transform_indices = @transform_0, window_bounds = array<i64: 8, 128>}, {transform_indices = @transform_1, window_bounds = array<i64: 8, 384>}, {pipeline_mode = #tpu.pipeline_mode<synchronous>, transform_indices = @transform_2, window_bounds = array<i64: 128, 256>}, {pipeline_mode = #tpu.pipeline_mode<synchronous>, transform_indices = @transform_3, window_bounds = array<i64: 128, 128>}, {pipeline_mode = #tpu.pipeline_mode<synchronous>, transform_indices = @transform_4, window_bounds = array<i64: 128, 128>}, {pipeline_mode = #tpu.pipeline_mode<synchronous>, transform_indices = @transform_5, window_bounds = array<i64: 1, 128>}, {pipeline_mode = #tpu.pipeline_mode<synchronous>, transform_indices = @transform_6, window_bounds = array<i64: 128, 384>}, {pipeline_mode = #tpu.pipeline_mode<synchronous>, transform_indices = @transform_7, window_bounds = array<i64: 1, 384>}, {transform_indices = @transform_8, window_bounds = array<i64: 8, 128>}, {transform_indices = @transform_9, window_bounds = array<i64: 8, 384>}]} {
    %c0 = arith.constant 0 : index
    %c0_0 = arith.constant 0 : index
    %0 = vector.load %arg3[%c0, %c0_0] : memref<128x256xf32, #tpu.memory_space<vmem>>, vector<128x256xf32>
    %cst = arith.constant 0.000000e+00 : f32
    %1 = vector.broadcast %cst : f32 to vector<8x128xf32>
    %cst_1 = arith.constant 0.000000e+00 : f32
    %2 = vector.broadcast %cst_1 : f32 to vector<8x128xf32>
    %c0_2 = arith.constant 0 : index
    %c0_3 = arith.constant 0 : index
    %3 = vector.load %arg2[%c0_2, %c0_3] : memref<8x384xf32, #tpu.memory_space<vmem>>, vector<8x128xf32>
    %cst_4 = arith.constant dense<0.000000e+00> : vector<8x256xf32>
    %4 = tpu.matmul %3, %0, %cst_4 {dimension_numbers = #tpu.dot_dimension_numbers<[1], [0], [0], [1], [0, 0, 1, 1], [], []>} : vector<8x128xf32>, vector<128x256xf32>, vector<8x256xf32> -> vector<8x256xf32>
    %5 = vector.extract_strided_slice %4 {offsets = [0, 0], sizes = [8, 128], strides = [1, 1]} : vector<8x256xf32> to vector<8x128xf32>
    %6 = vector.extract_strided_slice %4 {offsets = [0, 128], sizes = [8, 128], strides = [1, 1]} : vector<8x256xf32> to vector<8x128xf32>
    %c0_5 = arith.constant 0 : index
    %c0_6 = arith.constant 0 : index
    %7 = vector.load %arg11[%c0_5, %c0_6] : memref<8x384xf32, #tpu.memory_space<vmem>>, vector<8x128xf32>
    tpu.vector_store %arg11[%c0_5, %c0_6], %6 {strides = array<i32>} : memref<8x384xf32, #tpu.memory_space<vmem>>, vector<8x128xf32>,
    %8 = arith.mulf %5, %5 : vector<8x128xf32>
    %9 = arith.addf %1, %8 : vector<8x128xf32>
    %10 = arith.mulf %5, %6 : vector<8x128xf32>
    %11 = arith.addf %2, %10 : vector<8x128xf32>
    %c0_7 = arith.constant 0 : index
    %c128 = arith.constant 128 : index
    %12 = vector.load %arg2[%c0_7, %c128] : memref<8x384xf32, #tpu.memory_space<vmem>>, vector<8x128xf32>
    %cst_8 = arith.constant dense<0.000000e+00> : vector<8x256xf32>
    %13 = tpu.matmul %12, %0, %cst_8 {dimension_numbers = #tpu.dot_dimension_numbers<[1], [0], [0], [1], [0, 0, 1, 1], [], []>} : vector<8x128xf32>, vector<128x256xf32>, vector<8x256xf32> -> vector<8x256xf32>
    %14 = vector.extract_strided_slice %13 {offsets = [0, 0], sizes = [8, 128], strides = [1, 1]} : vector<8x256xf32> to vector<8x128xf32>
    %15 = vector.extract_strided_slice %13 {offsets = [0, 128], sizes = [8, 128], strides = [1, 1]} : vector<8x256xf32> to vector<8x128xf32>
    %c0_9 = arith.constant 0 : index
    %c128_10 = arith.constant 128 : index
    %16 = vector.load %arg11[%c0_9, %c128_10] : memref<8x384xf32, #tpu.memory_space<vmem>>, vector<8x128xf32>
    tpu.vector_store %arg11[%c0_9, %c128_10], %15 {strides = array<i32>} : memref<8x384xf32, #tpu.memory_space<vmem>>, vector<8x128xf32>,
    %17 = arith.mulf %14, %14 : vector<8x128xf32>
    %18 = arith.addf %9, %17 : vector<8x128xf32>
    %19 = arith.mulf %14, %15 : vector<8x128xf32>
    %20 = arith.addf %11, %19 : vector<8x128xf32>
    %c0_11 = arith.constant 0 : index
    %c256 = arith.constant 256 : index
    %21 = vector.load %arg2[%c0_11, %c256] : memref<8x384xf32, #tpu.memory_space<vmem>>, vector<8x128xf32>
    %cst_12 = arith.constant dense<0.000000e+00> : vector<8x256xf32>
    %22 = tpu.matmul %21, %0, %cst_12 {dimension_numbers = #tpu.dot_dimension_numbers<[1], [0], [0], [1], [0, 0, 1, 1], [], []>} : vector<8x128xf32>, vector<128x256xf32>, vector<8x256xf32> -> vector<8x256xf32>
    %23 = vector.extract_strided_slice %22 {offsets = [0, 0], sizes = [8, 128], strides = [1, 1]} : vector<8x256xf32> to vector<8x128xf32>
    %24 = vector.extract_strided_slice %22 {offsets = [0, 128], sizes = [8, 128], strides = [1, 1]} : vector<8x256xf32> to vector<8x128xf32>
    %c0_13 = arith.constant 0 : index
    %c256_14 = arith.constant 256 : index
    %25 = vector.load %arg11[%c0_13, %c256_14] : memref<8x384xf32, #tpu.memory_space<vmem>>, vector<8x128xf32>
    tpu.vector_store %arg11[%c0_13, %c256_14], %24 {strides = array<i32>} : memref<8x384xf32, #tpu.memory_space<vmem>>, vector<8x128xf32>,
    %26 = arith.mulf %23, %23 : vector<8x128xf32>
    %27 = arith.addf %18, %26 : vector<8x128xf32>
    %28 = arith.mulf %23, %24 : vector<8x128xf32>
    %29 = arith.addf %20, %28 : vector<8x128xf32>
    %cst_15 = arith.constant 9.99999993E-9 : f32
    %30 = vector.broadcast %cst_15 : f32 to vector<8x128xf32>
    %31 = arith.addf %27, %30 : vector<8x128xf32>
    %32 = math.sqrt %31 : vector<8x128xf32>
    %c0_16 = arith.constant 0 : index
    %c0_17 = arith.constant 0 : index
    %33 = vector.load %arg1[%c0_16, %c0_17] : memref<8x128xf32, #tpu.memory_space<vmem>>, vector<8x128xf32>
    %c0_18 = arith.constant 0 : index
    %c0_19 = arith.constant 0 : index
    %34 = vector.load %arg4[%c0_18, %c0_19] : memref<128x128xf32, #tpu.memory_space<vmem>>, vector<128x128xf32>
    %cst_20 = arith.constant dense<0.000000e+00> : vector<8x128xf32>
    %35 = tpu.matmul %33, %34, %cst_20 {dimension_numbers = #tpu.dot_dimension_numbers<[1], [0], [0], [1], [0, 0, 1, 1], [], []>} : vector<8x128xf32>, vector<128x128xf32>, vector<8x128xf32> -> vector<8x128xf32>
    %c0_21 = arith.constant 0 : index
    %c0_22 = arith.constant 0 : index
    %36 = vector.load %arg5[%c0_21, %c0_22] : memref<128x128xf32, #tpu.memory_space<vmem>>, vector<128x128xf32>
    %cst_23 = arith.constant dense<0.000000e+00> : vector<8x128xf32>
    %37 = tpu.matmul %32, %36, %cst_23 {dimension_numbers = #tpu.dot_dimension_numbers<[1], [0], [0], [1], [0, 0, 1, 1], [], []>} : vector<8x128xf32>, vector<128x128xf32>, vector<8x128xf32> -> vector<8x128xf32>
    %38 = arith.addf %35, %37 : vector<8x128xf32>
    %c0_24 = arith.constant 0 : index
    %c0_25 = arith.constant 0 : index
    %39 = vector.load %arg6[%c0_24, %c0_25] : memref<1x128xf32, #tpu.memory_space<vmem>>, vector<1x128xf32>
    %40 = vector.broadcast %39 : vector<1x128xf32> to vector<8x128xf32>
    %41 = arith.addf %38, %40 : vector<8x128xf32>
    %42 = arith.negf %41 : vector<8x128xf32>
    %43 = math.exp %42 : vector<8x128xf32>
    %cst_26 = arith.constant 1.000000e+00 : f32
    %44 = vector.broadcast %cst_26 : f32 to vector<8x128xf32>
    %45 = arith.addf %44, %43 : vector<8x128xf32>
    %46 = arith.divf %44, %45 : vector<8x128xf32>
    %47 = arith.mulf %41, %46 : vector<8x128xf32>
    %c0_27 = arith.constant 0 : index
    %c0_28 = arith.constant 0 : index
    %48 = vector.load %arg7[%c0_27, %c0_28] : memref<128x384xf32, #tpu.memory_space<vmem>>, vector<128x384xf32>
    %cst_29 = arith.constant dense<0.000000e+00> : vector<8x384xf32>
    %49 = tpu.matmul %47, %48, %cst_29 {dimension_numbers = #tpu.dot_dimension_numbers<[1], [0], [0], [1], [0, 0, 1, 1], [], []>} : vector<8x128xf32>, vector<128x384xf32>, vector<8x384xf32> -> vector<8x384xf32>
    %c0_30 = arith.constant 0 : index
    %c0_31 = arith.constant 0 : index
    %50 = vector.load %arg8[%c0_30, %c0_31] : memref<1x384xf32, #tpu.memory_space<vmem>>, vector<1x384xf32>
    %51 = vector.broadcast %50 : vector<1x384xf32> to vector<8x384xf32>
    %52 = arith.addf %49, %51 : vector<8x384xf32>
    %53 = vector.extract_strided_slice %52 {offsets = [0, 0], sizes = [8, 128], strides = [1, 1]} : vector<8x384xf32> to vector<8x128xf32>
    %54 = vector.extract_strided_slice %52 {offsets = [0, 128], sizes = [8, 128], strides = [1, 1]} : vector<8x384xf32> to vector<8x128xf32>
    %55 = vector.extract_strided_slice %52 {offsets = [0, 256], sizes = [8, 128], strides = [1, 1]} : vector<8x384xf32> to vector<8x128xf32>
    %56 = arith.addf %33, %53 : vector<8x128xf32>
    %57 = arith.mulf %55, %29 : vector<8x128xf32>
    %58 = arith.addf %56, %57 : vector<8x128xf32>
    %c0_32 = arith.constant 0 : index
    %c0_33 = arith.constant 0 : index
    %59 = vector.load %arg9[%c0_32, %c0_33] : memref<8x128xf32, #tpu.memory_space<vmem>>, vector<8x128xf32>
    tpu.vector_store %arg9[%c0_32, %c0_33], %58 {strides = array<i32>} : memref<8x128xf32, #tpu.memory_space<vmem>>, vector<8x128xf32>,
    %c0_34 = arith.constant 0 : index
    %c0_35 = arith.constant 0 : index
    %60 = vector.load %arg11[%c0_34, %c0_35] : memref<8x384xf32, #tpu.memory_space<vmem>>, vector<8x128xf32>
    %61 = arith.mulf %54, %60 : vector<8x128xf32>
    %c0_36 = arith.constant 0 : index
    %c0_37 = arith.constant 0 : index
    %62 = vector.load %arg2[%c0_36, %c0_37] : memref<8x384xf32, #tpu.memory_space<vmem>>, vector<8x128xf32>
    %63 = arith.addf %62, %61 : vector<8x128xf32>
    %c0_38 = arith.constant 0 : index
    %c0_39 = arith.constant 0 : index
    %64 = vector.load %arg10[%c0_38, %c0_39] : memref<8x384xf32, #tpu.memory_space<vmem>>, vector<8x128xf32>
    tpu.vector_store %arg10[%c0_38, %c0_39], %63 {strides = array<i32>} : memref<8x384xf32, #tpu.memory_space<vmem>>, vector<8x128xf32>,
    %c0_40 = arith.constant 0 : index
    %c128_41 = arith.constant 128 : index
    %65 = vector.load %arg11[%c0_40, %c128_41] : memref<8x384xf32, #tpu.memory_space<vmem>>, vector<8x128xf32>
    %66 = arith.mulf %54, %65 : vector<8x128xf32>
    %c0_42 = arith.constant 0 : index
    %c128_43 = arith.constant 128 : index
    %67 = vector.load %arg2[%c0_42, %c128_43] : memref<8x384xf32, #tpu.memory_space<vmem>>, vector<8x128xf32>
    %68 = arith.addf %67, %66 : vector<8x128xf32>
    %c0_44 = arith.constant 0 : index
    %c128_45 = arith.constant 128 : index
    %69 = vector.load %arg10[%c0_44, %c128_45] : memref<8x384xf32, #tpu.memory_space<vmem>>, vector<8x128xf32>
    tpu.vector_store %arg10[%c0_44, %c128_45], %68 {strides = array<i32>} : memref<8x384xf32, #tpu.memory_space<vmem>>, vector<8x128xf32>,
    %c0_46 = arith.constant 0 : index
    %c256_47 = arith.constant 256 : index
    %70 = vector.load %arg11[%c0_46, %c256_47] : memref<8x384xf32, #tpu.memory_space<vmem>>, vector<8x128xf32>
    %71 = arith.mulf %54, %70 : vector<8x128xf32>
    %c0_48 = arith.constant 0 : index
    %c256_49 = arith.constant 256 : index
    %72 = vector.load %arg2[%c0_48, %c256_49] : memref<8x384xf32, #tpu.memory_space<vmem>>, vector<8x128xf32>
    %73 = arith.addf %72, %71 : vector<8x128xf32>
    %c0_50 = arith.constant 0 : index
    %c256_51 = arith.constant 256 : index
    %74 = vector.load %arg10[%c0_50, %c256_51] : memref<8x384xf32, #tpu.memory_space<vmem>>, vector<8x128xf32>
    tpu.vector_store %arg10[%c0_50, %c256_51], %73 {strides = array<i32>} : memref<8x384xf32, #tpu.memory_space<vmem>>, vector<8x128xf32>,
    return
  }
  func.func @transform_0(%arg0: i32) -> (i32, i32) {
    %c0_i32 = arith.constant 0 : i32
    %c0_i32_0 = arith.constant 0 : i32
    return %arg0, %c0_i32 : i32, i32
  }
  func.func @transform_1(%arg0: i32) -> (i32, i32) {
    %c0_i32 = arith.constant 0 : i32
    %c0_i32_0 = arith.constant 0 : i32
    return %arg0, %c0_i32 : i32, i32
  }
  func.func @transform_2(%arg0: i32) -> (i32, i32) {
    %c0_i32 = arith.constant 0 : i32
    %c0_i32_0 = arith.constant 0 : i32
    %c0_i32_1 = arith.constant 0 : i32
    return %c0_i32, %c0_i32_0 : i32, i32
  }
  func.func @transform_3(%arg0: i32) -> (i32, i32) {
    %c0_i32 = arith.constant 0 : i32
    %c0_i32_0 = arith.constant 0 : i32
    %c0_i32_1 = arith.constant 0 : i32
    return %c0_i32, %c0_i32_0 : i32, i32
  }
  func.func @transform_4(%arg0: i32) -> (i32, i32) {
    %c0_i32 = arith.constant 0 : i32
    %c0_i32_0 = arith.constant 0 : i32
    %c0_i32_1 = arith.constant 0 : i32
    return %c0_i32, %c0_i32_0 : i32, i32
  }
  func.func @transform_5(%arg0: i32) -> (i32, i32) {
    %c0_i32 = arith.constant 0 : i32
    %c0_i32_0 = arith.constant 0 : i32
    %c0_i32_1 = arith.constant 0 : i32
    return %c0_i32, %c0_i32_0 : i32, i32
  }
  func.func @transform_6(%arg0: i32) -> (i32, i32) {
    %c0_i32 = arith.constant 0 : i32
    %c0_i32_0 = arith.constant 0 : i32
    %c0_i32_1 = arith.constant 0 : i32
    return %c0_i32, %c0_i32_0 : i32, i32
  }
  func.func @transform_7(%arg0: i32) -> (i32, i32) {
    %c0_i32 = arith.constant 0 : i32
    %c0_i32_0 = arith.constant 0 : i32
    %c0_i32_1 = arith.constant 0 : i32
    return %c0_i32, %c0_i32_0 : i32, i32
  }
  func.func @transform_8(%arg0: i32) -> (i32, i32) {
    %c0_i32 = arith.constant 0 : i32
    %c0_i32_0 = arith.constant 0 : i32
    return %arg0, %c0_i32 : i32, i32
  }
  func.func @transform_9(%arg0: i32) -> (i32, i32) {
    %c0_i32 = arith.constant 0 : i32
    %c0_i32_0 = arith.constant 0 : i32
    return %arg0, %c0_i32 : i32, i32
  }
}

module attributes {stable_mosaic.version = 11 : i64} {
  func.func @_painn_mixing_kernel(%arg0: i32, %arg1: memref<8x128xf32, #tpu.memory_space<vmem>>, %arg2: memref<8x384xf32, #tpu.memory_space<vmem>>, %arg3: memref<128x256xf32, #tpu.memory_space<vmem>>, %arg4: memref<128x128xf32, #tpu.memory_space<vmem>>, %arg5: memref<128x128xf32, #tpu.memory_space<vmem>>, %arg6: memref<1x128xf32, #tpu.memory_space<vmem>>, %arg7: memref<128x384xf32, #tpu.memory_space<vmem>>, %arg8: memref<1x384xf32, #tpu.memory_space<vmem>>, %arg9: memref<8x128xf32, #tpu.memory_space<vmem>>, %arg10: memref<8x384xf32, #tpu.memory_space<vmem>>, %arg11: memref<8x384xf32, #tpu.memory_space<vmem>>) attributes {dimension_semantics = [#tpu.dimension_semantics<parallel>], iteration_bounds = array<i64: 2>, scalar_prefetch = 0 : i64, scratch_operands = 1 : i64, tpu.core_type = #tpu.core_type<tc>, window_params = [{transform_indices = @transform_0, window_bounds = array<i64: 8, 128>}, {transform_indices = @transform_1, window_bounds = array<i64: 8, 384>}, {pipeline_mode = #tpu.pipeline_mode<synchronous>, transform_indices = @transform_2, window_bounds = array<i64: 128, 256>}, {pipeline_mode = #tpu.pipeline_mode<synchronous>, transform_indices = @transform_3, window_bounds = array<i64: 128, 128>}, {pipeline_mode = #tpu.pipeline_mode<synchronous>, transform_indices = @transform_4, window_bounds = array<i64: 128, 128>}, {pipeline_mode = #tpu.pipeline_mode<synchronous>, transform_indices = @transform_5, window_bounds = array<i64: 1, 128>}, {pipeline_mode = #tpu.pipeline_mode<synchronous>, transform_indices = @transform_6, window_bounds = array<i64: 128, 384>}, {pipeline_mode = #tpu.pipeline_mode<synchronous>, transform_indices = @transform_7, window_bounds = array<i64: 1, 384>}, {transform_indices = @transform_8, window_bounds = array<i64: 8, 128>}, {transform_indices = @transform_9, window_bounds = array<i64: 8, 384>}]} {
    %c0 = arith.constant 0 : index
    %c0_0 = arith.constant 0 : index
    %0 = vector.load %arg3[%c0, %c0_0] : memref<128x256xf32, #tpu.memory_space<vmem>>, vector<128x256xf32>
    %cst = arith.constant 0.000000e+00 : f32
    %1 = vector.broadcast %cst : f32 to vector<8x128xf32>
    %cst_1 = arith.constant 0.000000e+00 : f32
    %2 = vector.broadcast %cst_1 : f32 to vector<8x128xf32>
    %c0_2 = arith.constant 0 : index
    %c0_3 = arith.constant 0 : index
    %3 = vector.load %arg2[%c0_2, %c0_3] : memref<8x384xf32, #tpu.memory_space<vmem>>, vector<8x128xf32>
    %cst_4 = arith.constant dense<0.000000e+00> : vector<8x256xf32>
    %4 = tpu.matmul %3, %0, %cst_4 {dimension_numbers = #tpu.dot_dimension_numbers<[1], [0], [0], [1], [0, 0, 1, 1], [], []>} : vector<8x128xf32>, vector<128x256xf32>, vector<8x256xf32> -> vector<8x256xf32>
    %5 = vector.extract_strided_slice %4 {offsets = [0, 0], sizes = [8, 128], strides = [1, 1]} : vector<8x256xf32> to vector<8x128xf32>
    %6 = vector.extract_strided_slice %4 {offsets = [0, 128], sizes = [8, 128], strides = [1, 1]} : vector<8x256xf32> to vector<8x128xf32>
    %c0_5 = arith.constant 0 : index
    %c0_6 = arith.constant 0 : index
    %7 = vector.load %arg11[%c0_5, %c0_6] : memref<8x384xf32, #tpu.memory_space<vmem>>, vector<8x128xf32>
    tpu.vector_store %arg11[%c0_5, %c0_6], %6 {strides = array<i32>} : memref<8x384xf32, #tpu.memory_space<vmem>>, vector<8x128xf32>,
    %8 = arith.mulf %5, %5 : vector<8x128xf32>
    %9 = arith.addf %1, %8 : vector<8x128xf32>
    %10 = arith.mulf %5, %6 : vector<8x128xf32>
    %11 = arith.addf %2, %10 : vector<8x128xf32>
    %c0_7 = arith.constant 0 : index
    %c128 = arith.constant 128 : index
    %12 = vector.load %arg2[%c0_7, %c128] : memref<8x384xf32, #tpu.memory_space<vmem>>, vector<8x128xf32>
    %cst_8 = arith.constant dense<0.000000e+00> : vector<8x256xf32>
    %13 = tpu.matmul %12, %0, %cst_8 {dimension_numbers = #tpu.dot_dimension_numbers<[1], [0], [0], [1], [0, 0, 1, 1], [], []>} : vector<8x128xf32>, vector<128x256xf32>, vector<8x256xf32> -> vector<8x256xf32>
    %14 = vector.extract_strided_slice %13 {offsets = [0, 0], sizes = [8, 128], strides = [1, 1]} : vector<8x256xf32> to vector<8x128xf32>
    %15 = vector.extract_strided_slice %13 {offsets = [0, 128], sizes = [8, 128], strides = [1, 1]} : vector<8x256xf32> to vector<8x128xf32>
    %c0_9 = arith.constant 0 : index
    %c128_10 = arith.constant 128 : index
    %16 = vector.load %arg11[%c0_9, %c128_10] : memref<8x384xf32, #tpu.memory_space<vmem>>, vector<8x128xf32>
    tpu.vector_store %arg11[%c0_9, %c128_10], %15 {strides = array<i32>} : memref<8x384xf32, #tpu.memory_space<vmem>>, vector<8x128xf32>,
    %17 = arith.mulf %14, %14 : vector<8x128xf32>
    %18 = arith.addf %9, %17 : vector<8x128xf32>
    %19 = arith.mulf %14, %15 : vector<8x128xf32>
    %20 = arith.addf %11, %19 : vector<8x128xf32>
    %c0_11 = arith.constant 0 : index
    %c256 = arith.constant 256 : index
    %21 = vector.load %arg2[%c0_11, %c256] : memref<8x384xf32, #tpu.memory_space<vmem>>, vector<8x128xf32>
    %cst_12 = arith.constant dense<0.000000e+00> : vector<8x256xf32>
    %22 = tpu.matmul %21, %0, %cst_12 {dimension_numbers = #tpu.dot_dimension_numbers<[1], [0], [0], [1], [0, 0, 1, 1], [], []>} : vector<8x128xf32>, vector<128x256xf32>, vector<8x256xf32> -> vector<8x256xf32>
    %23 = vector.extract_strided_slice %22 {offsets = [0, 0], sizes = [8, 128], strides = [1, 1]} : vector<8x256xf32> to vector<8x128xf32>
    %24 = vector.extract_strided_slice %22 {offsets = [0, 128], sizes = [8, 128], strides = [1, 1]} : vector<8x256xf32> to vector<8x128xf32>
    %c0_13 = arith.constant 0 : index
    %c256_14 = arith.constant 256 : index
    %25 = vector.load %arg11[%c0_13, %c256_14] : memref<8x384xf32, #tpu.memory_space<vmem>>, vector<8x128xf32>
    tpu.vector_store %arg11[%c0_13, %c256_14], %24 {strides = array<i32>} : memref<8x384xf32, #tpu.memory_space<vmem>>, vector<8x128xf32>,
    %26 = arith.mulf %23, %23 : vector<8x128xf32>
    %27 = arith.addf %18, %26 : vector<8x128xf32>
    %28 = arith.mulf %23, %24 : vector<8x128xf32>
    %29 = arith.addf %20, %28 : vector<8x128xf32>
    %cst_15 = arith.constant 9.99999993E-9 : f32
    %30 = vector.broadcast %cst_15 : f32 to vector<8x128xf32>
    %31 = arith.addf %27, %30 : vector<8x128xf32>
    %32 = math.sqrt %31 : vector<8x128xf32>
    %c0_16 = arith.constant 0 : index
    %c0_17 = arith.constant 0 : index
    %33 = vector.load %arg1[%c0_16, %c0_17] : memref<8x128xf32, #tpu.memory_space<vmem>>, vector<8x128xf32>
    %c0_18 = arith.constant 0 : index
    %c0_19 = arith.constant 0 : index
    %34 = vector.load %arg4[%c0_18, %c0_19] : memref<128x128xf32, #tpu.memory_space<vmem>>, vector<128x128xf32>
    %cst_20 = arith.constant dense<0.000000e+00> : vector<8x128xf32>
    %35 = tpu.matmul %33, %34, %cst_20 {dimension_numbers = #tpu.dot_dimension_numbers<[1], [0], [0], [1], [0, 0, 1, 1], [], []>} : vector<8x128xf32>, vector<128x128xf32>, vector<8x128xf32> -> vector<8x128xf32>
    %c0_21 = arith.constant 0 : index
    %c0_22 = arith.constant 0 : index
    %36 = vector.load %arg5[%c0_21, %c0_22] : memref<128x128xf32, #tpu.memory_space<vmem>>, vector<128x128xf32>
    %cst_23 = arith.constant dense<0.000000e+00> : vector<8x128xf32>
    %37 = tpu.matmul %32, %36, %cst_23 {dimension_numbers = #tpu.dot_dimension_numbers<[1], [0], [0], [1], [0, 0, 1, 1], [], []>} : vector<8x128xf32>, vector<128x128xf32>, vector<8x128xf32> -> vector<8x128xf32>
    %38 = arith.addf %35, %37 : vector<8x128xf32>
    %c0_24 = arith.constant 0 : index
    %c0_25 = arith.constant 0 : index
    %39 = vector.load %arg6[%c0_24, %c0_25] : memref<1x128xf32, #tpu.memory_space<vmem>>, vector<1x128xf32>
    %40 = vector.broadcast %39 : vector<1x128xf32> to vector<8x128xf32>
    %41 = arith.addf %38, %40 : vector<8x128xf32>
    %42 = arith.negf %41 : vector<8x128xf32>
    %43 = math.exp %42 : vector<8x128xf32>
    %cst_26 = arith.constant 1.000000e+00 : f32
    %44 = vector.broadcast %cst_26 : f32 to vector<8x128xf32>
    %45 = arith.addf %44, %43 : vector<8x128xf32>
    %46 = arith.divf %44, %45 : vector<8x128xf32>
    %47 = arith.mulf %41, %46 : vector<8x128xf32>
    %c0_27 = arith.constant 0 : index
    %c0_28 = arith.constant 0 : index
    %48 = vector.load %arg7[%c0_27, %c0_28] : memref<128x384xf32, #tpu.memory_space<vmem>>, vector<128x384xf32>
    %cst_29 = arith.constant dense<0.000000e+00> : vector<8x384xf32>
    %49 = tpu.matmul %47, %48, %cst_29 {dimension_numbers = #tpu.dot_dimension_numbers<[1], [0], [0], [1], [0, 0, 1, 1], [], []>} : vector<8x128xf32>, vector<128x384xf32>, vector<8x384xf32> -> vector<8x384xf32>
    %c0_30 = arith.constant 0 : index
    %c0_31 = arith.constant 0 : index
    %50 = vector.load %arg8[%c0_30, %c0_31] : memref<1x384xf32, #tpu.memory_space<vmem>>, vector<1x384xf32>
    %51 = vector.broadcast %50 : vector<1x384xf32> to vector<8x384xf32>
    %52 = arith.addf %49, %51 : vector<8x384xf32>
    %53 = vector.extract_strided_slice %52 {offsets = [0, 0], sizes = [8, 128], strides = [1, 1]} : vector<8x384xf32> to vector<8x128xf32>
    %54 = vector.extract_strided_slice %52 {offsets = [0, 128], sizes = [8, 128], strides = [1, 1]} : vector<8x384xf32> to vector<8x128xf32>
    %55 = vector.extract_strided_slice %52 {offsets = [0, 256], sizes = [8, 128], strides = [1, 1]} : vector<8x384xf32> to vector<8x128xf32>
    %56 = arith.addf %33, %53 : vector<8x128xf32>
    %57 = arith.mulf %55, %29 : vector<8x128xf32>
    %58 = arith.addf %56, %57 : vector<8x128xf32>
    %c0_32 = arith.constant 0 : index
    %c0_33 = arith.constant 0 : index
    %59 = vector.load %arg9[%c0_32, %c0_33] : memref<8x128xf32, #tpu.memory_space<vmem>>, vector<8x128xf32>
    tpu.vector_store %arg9[%c0_32, %c0_33], %58 {strides = array<i32>} : memref<8x128xf32, #tpu.memory_space<vmem>>, vector<8x128xf32>,
    %c0_34 = arith.constant 0 : index
    %c0_35 = arith.constant 0 : index
    %60 = vector.load %arg11[%c0_34, %c0_35] : memref<8x384xf32, #tpu.memory_space<vmem>>, vector<8x128xf32>
    %61 = arith.mulf %54, %60 : vector<8x128xf32>
    %c0_36 = arith.constant 0 : index
    %c0_37 = arith.constant 0 : index
    %62 = vector.load %arg2[%c0_36, %c0_37] : memref<8x384xf32, #tpu.memory_space<vmem>>, vector<8x128xf32>
    %63 = arith.addf %62, %61 : vector<8x128xf32>
    %c0_38 = arith.constant 0 : index
    %c0_39 = arith.constant 0 : index
    %64 = vector.load %arg10[%c0_38, %c0_39] : memref<8x384xf32, #tpu.memory_space<vmem>>, vector<8x128xf32>
    tpu.vector_store %arg10[%c0_38, %c0_39], %63 {strides = array<i32>} : memref<8x384xf32, #tpu.memory_space<vmem>>, vector<8x128xf32>,
    %c0_40 = arith.constant 0 : index
    %c128_41 = arith.constant 128 : index
    %65 = vector.load %arg11[%c0_40, %c128_41] : memref<8x384xf32, #tpu.memory_space<vmem>>, vector<8x128xf32>
    %66 = arith.mulf %54, %65 : vector<8x128xf32>
    %c0_42 = arith.constant 0 : index
    %c128_43 = arith.constant 128 : index
    %67 = vector.load %arg2[%c0_42, %c128_43] : memref<8x384xf32, #tpu.memory_space<vmem>>, vector<8x128xf32>
    %68 = arith.addf %67, %66 : vector<8x128xf32>
    %c0_44 = arith.constant 0 : index
    %c128_45 = arith.constant 128 : index
    %69 = vector.load %arg10[%c0_44, %c128_45] : memref<8x384xf32, #tpu.memory_space<vmem>>, vector<8x128xf32>
    tpu.vector_store %arg10[%c0_44, %c128_45], %68 {strides = array<i32>} : memref<8x384xf32, #tpu.memory_space<vmem>>, vector<8x128xf32>,
    %c0_46 = arith.constant 0 : index
    %c256_47 = arith.constant 256 : index
    %70 = vector.load %arg11[%c0_46, %c256_47] : memref<8x384xf32, #tpu.memory_space<vmem>>, vector<8x128xf32>
    %71 = arith.mulf %54, %70 : vector<8x128xf32>
    %c0_48 = arith.constant 0 : index
    %c256_49 = arith.constant 256 : index
    %72 = vector.load %arg2[%c0_48, %c256_49] : memref<8x384xf32, #tpu.memory_space<vmem>>, vector<8x128xf32>
    %73 = arith.addf %72, %71 : vector<8x128xf32>
    %c0_50 = arith.constant 0 : index
    %c256_51 = arith.constant 256 : index
    %74 = vector.load %arg10[%c0_50, %c256_51] : memref<8x384xf32, #tpu.memory_space<vmem>>, vector<8x128xf32>
    tpu.vector_store %arg10[%c0_50, %c256_51], %73 {strides = array<i32>} : memref<8x384xf32, #tpu.memory_space<vmem>>, vector<8x128xf32>,
    return
  }
  func.func @transform_0(%arg0: i32) -> (i32, i32) {
    %c0_i32 = arith.constant 0 : i32
    %c0_i32_0 = arith.constant 0 : i32
    return %arg0, %c0_i32 : i32, i32
  }
  func.func @transform_1(%arg0: i32) -> (i32, i32) {
    %c0_i32 = arith.constant 0 : i32
    %c0_i32_0 = arith.constant 0 : i32
    return %arg0, %c0_i32 : i32, i32
  }
  func.func @transform_2(%arg0: i32) -> (i32, i32) {
    %c0_i32 = arith.constant 0 : i32
    %c0_i32_0 = arith.constant 0 : i32
    %c0_i32_1 = arith.constant 0 : i32
    return %c0_i32, %c0_i32_0 : i32, i32
  }
  func.func @transform_3(%arg0: i32) -> (i32, i32) {
    %c0_i32 = arith.constant 0 : i32
    %c0_i32_0 = arith.constant 0 : i32
    %c0_i32_1 = arith.constant 0 : i32
    return %c0_i32, %c0_i32_0 : i32, i32
  }
  func.func @transform_4(%arg0: i32) -> (i32, i32) {
    %c0_i32 = arith.constant 0 : i32
    %c0_i32_0 = arith.constant 0 : i32
    %c0_i32_1 = arith.constant 0 : i32
    return %c0_i32, %c0_i32_0 : i32, i32
  }
  func.func @transform_5(%arg0: i32) -> (i32, i32) {
    %c0_i32 = arith.constant 0 : i32
    %c0_i32_0 = arith.constant 0 : i32
    %c0_i32_1 = arith.constant 0 : i32
    return %c0_i32, %c0_i32_0 : i32, i32
  }
  func.func @transform_6(%arg0: i32) -> (i32, i32) {
    %c0_i32 = arith.constant 0 : i32
    %c0_i32_0 = arith.constant 0 : i32
    %c0_i32_1 = arith.constant 0 : i32
    return %c0_i32, %c0_i32_0 : i32, i32
  }
  func.func @transform_7(%arg0: i32) -> (i32, i32) {
    %c0_i32 = arith.constant 0 : i32
    %c0_i32_0 = arith.constant 0 : i32
    %c0_i32_1 = arith.constant 0 : i32
    return %c0_i32, %c0_i32_0 : i32, i32
  }
  func.func @transform_8(%arg0: i32) -> (i32, i32) {
    %c0_i32 = arith.constant 0 : i32
    %c0_i32_0 = arith.constant 0 : i32
    return %arg0, %c0_i32 : i32, i32
  }
  func.func @transform_9(%arg0: i32) -> (i32, i32) {
    %c0_i32 = arith.constant 0 : i32
    %c0_i32_0 = arith.constant 0 : i32
    return %arg0, %c0_i32 : i32, i32
  }
}

</mosaic_0001>

<llo_original>
// kernel: tpu_custom_call.1
$region0: #{tpu_custom_call.1}
  #allocation0 [shape = 'u32[]', space=smem, size = 0x4, offset = 0x4, fixed_abs, tag = 'smem constant byte address 0x4 - core index']
  #allocation1 [shape = 'u32[72,128]{1,0:T(1,128)}', space=vmem, size = 0x9000, scoped, tag = 'internal scratch']
  #allocation2 [shape = 'f32[8,384]{1,0:T(8,128)}', space=vmem, size = 0x3000, scoped, tag = 'scratch operand']
  %s0 = inlined_call_operand.hbm [shape: f32[16,128], index: 0, kind: input, shape index: {}]
  %s1 = inlined_call_operand.hbm [shape: f32[16,384], index: 1, kind: input, shape index: {}]
  %s2 = inlined_call_operand.hbm [shape: f32[128,256], index: 2, kind: input, shape index: {}]
  %s3 = inlined_call_operand.hbm [shape: f32[128,128], index: 3, kind: input, shape index: {}]
  %s4 = inlined_call_operand.hbm [shape: f32[128,128], index: 4, kind: input, shape index: {}]
  %s5 = inlined_call_operand.vmem [shape: f32[1,128], index: 5, kind: input, shape index: {}]
  %s6 = inlined_call_operand.hbm [shape: f32[128,384], index: 6, kind: input, shape index: {}]
  %s7 = inlined_call_operand.vmem [shape: f32[1,384], index: 7, kind: input, shape index: {}]
  %s8 = inlined_call_operand.hbm [shape: f32[16,128], index: 8, kind: output, shape index: {0}]
  %s9 = inlined_call_operand.hbm [shape: f32[16,384], index: 9, kind: output, shape index: {1}]
  %10 = xla_tuple %s8, %s9
  %s11 = sld [smem:[#allocation0]]
  $region97: #{tpu_custom_call.1} parent=0
    _
  %s13 = ssub.s32 1, %s11
  %s14 = scalar_select 0, %s13, %s11
  $region1: #{tpu_custom_call.1} parent=0
    #allocation3 [shape = 'u8[8192]{0}', space=vmem, size = 0x2000, scoped, tag = 'input window, operand 0']
    #allocation4 [shape = 's32[2]{0}', space=sflag, size = 0x8, scoped, tag = 'scoped memory for tpu_custom_call.1']
    #allocation5 [shape = 's32[2]{0}', space=sflag, size = 0x8, scoped, tag = 'scoped memory for tpu_custom_call.1']
    #allocation6 [shape = 'u8[24576]{0}', space=vmem, size = 0x6000, scoped, tag = 'input window, operand 1']
    #allocation7 [shape = 's32[2]{0}', space=sflag, size = 0x8, scoped, tag = 'scoped memory for tpu_custom_call.1']
    #allocation8 [shape = 'u8[131072]{0}', space=vmem, size = 0x20000, scoped, tag = 'input window, operand 2, single buffered']
    #allocation9 [shape = 'u8[65536]{0}', space=vmem, size = 0x10000, scoped, tag = 'input window, operand 3, single buffered']
    #allocation10 [shape = 's32[1]{0}', space=sflag, size = 0x4, scoped, tag = 'scoped memory for tpu_custom_call.1']
    #allocation11 [shape = 'u8[65536]{0}', space=vmem, size = 0x10000, scoped, tag = 'input window, operand 4, single buffered']
    #allocation12 [shape = 'u8[196608]{0}', space=vmem, size = 0x30000, scoped, tag = 'input window, operand 6, single buffered']
    #allocation13 [shape = 's32[1]{0}', space=sflag, size = 0x4, scoped, tag = 'scoped memory for tpu_custom_call.1']
    #allocation14 [shape = 'u8[8192]{0}', space=vmem, size = 0x2000, scoped, tag = 'output window, operand 0']
    #allocation15 [shape = 'u8[24576]{0}', space=vmem, size = 0x6000, scoped, tag = 'output window, operand 1']
    #allocation16 [shape = 's32[2]{0}', space=sflag, size = 0x8, scoped, tag = 'scoped memory for tpu_custom_call.1']
    %15 = vsyncpa [#allocation4], 0
    %s16 = scalar_lea.sflag [#allocation4], 1
    %17 = vsyncpa %s16, 0
    %18 = vsyncpa [#allocation7], 0
    %s19 = scalar_lea.sflag [#allocation7], 1
    %20 = vsyncpa %s19, 0
    %21 = vsyncpa [#allocation10], 0
    %22 = vsyncpa [#allocation13], 0
    %23 = vsyncpa [#allocation5], 0
    %s24 = scalar_lea.sflag [#allocation5], 1
    %25 = vsyncpa %s24, 0
    %26 = vsyncpa [#allocation16], 0
    %s27 = scalar_lea.sflag [#allocation16], 1
    %28 = vsyncpa %s27, 0
    loop: start=0, step=1, limit=4
    $region2: #{tpu_custom_call.1} parent=1 // loop_pre_header
      _
    $region3: #{tpu_custom_call.1} parent=1 // loop_header
      %s30 = sphi 0, %s34
      %p31 = scmp.ge.s32.totalorder %s30, 4
      %s40 = sphi 0, %s42
      %s43 = sphi 0, %s40
      %s44 = sphi 0, %s43
      %s60 = sphi 0, %s44
      %s66 = sphi 0, %s68
      %s69 = sphi 0, %s66
      %s70 = sphi 0, %s69
      %s86 = sphi 0, %s70
      %s90 = sphi 0, %s90
      %s92 = sphi 0, %s90
      %s93 = sphi 0, %s92
      %s107 = sphi 0, %s93
      %s111 = sphi 0, %s111
      %s113 = sphi 0, %s111
      %s114 = sphi 0, %s113
      %s128 = sphi 0, %s114
      %s132 = sphi 0, %s132
      %s134 = sphi 0, %s132
      %s135 = sphi 0, %s134
      %s149 = sphi 0, %s135
      %s153 = sphi 0, %s153
      %s155 = sphi 0, %s153
      %s156 = sphi 0, %s155
      %s170 = sphi 0, %s156
      %s174 = sphi 0, %s174
      %s176 = sphi 0, %s174
      %s177 = sphi 0, %s176
      %s191 = sphi 0, %s177
      %s195 = sphi 0, %s195
      %s197 = sphi 0, %s195
      %s198 = sphi 0, %s197
      %s212 = sphi 0, %s198
      %s218 = sphi 0, %s220
      %s221 = sphi 0, %s218
      %s222 = sphi 0, %s221
      %s238 = sphi 0, %s222
      %s244 = sphi 0, %s246
      %s247 = sphi 0, %s244
      %s248 = sphi 0, %s247
      %s264 = sphi 0, %s248
    $region4: #{tpu_custom_call.1} parent=1 // loop_header_branch
      %33 = sbr.rel (%p31) target = $region8
    $region5: #{tpu_custom_call.1} parent=1 // loop_body
      %s35 = ssub.s32 %s30, 1
      %s36 = ssub.s32 %s30, 2
      %s37 = sadd.s32 %s30, 1
      %s38 = ssub.s32 %s30, %s37
      %p39 = scmp.eq.s32.totalorder %s38, 0
      %s41 = sadd.s32 %s40, 1
      %s42 = scalar_select %p39, %s40, %s41
      %p45 = pneg %p39
      %p46 = scmp.eq.s32.totalorder %s30, 1
      %p47 = por %p45, %p46
      %p48 = scmp.ne.s32.totalorder %s40, %s43
      %p49 = scmp.eq.s32.totalorder %s30, 0
      %p50 = por %p48, %p49
      %p51 = scmp.ne.s32.totalorder %s40, %s43
      %p52 = scmp.eq.s32.totalorder %s35, 1
      %p53 = por %p51, %p52
      %p54 = scmp.ne.s32.totalorder %s43, %s44
      %p55 = scmp.eq.s32.totalorder %s35, 0
      %p56 = por %p54, %p55
      %p57 = scmp.ne.s32.totalorder %s43, %s44
      %p58 = scmp.eq.s32.totalorder %s36, 1
      %p59 = por %p57, %p58
      %p61 = scmp.ne.s32.totalorder %s44, %s60
      %p62 = scmp.eq.s32.totalorder %s36, 0
      %p63 = por %p61, %p62
      %s64 = ssub.s32 %s30, %s37
      %p65 = scmp.eq.s32.totalorder %s64, 0
      %s67 = sadd.s32 %s66, 1
      %s68 = scalar_select %p65, %s66, %s67
      %p71 = pneg %p65
      %p72 = scmp.eq.s32.totalorder %s30, 1
      %p73 = por %p71, %p72
      %p74 = scmp.ne.s32.totalorder %s66, %s69
      %p75 = scmp.eq.s32.totalorder %s30, 0
      %p76 = por %p74, %p75
      %p77 = scmp.ne.s32.totalorder %s66, %s69
      %p78 = scmp.eq.s32.totalorder %s35, 1
      %p79 = por %p77, %p78
      %p80 = scmp.ne.s32.totalorder %s69, %s70
      %p81 = scmp.eq.s32.totalorder %s35, 0
      %p82 = por %p80, %p81
      %p83 = scmp.ne.s32.totalorder %s69, %s70
      %p84 = scmp.eq.s32.totalorder %s36, 1
      %p85 = por %p83, %p84
      %p87 = scmp.ne.s32.totalorder %s70, %s86
      %p88 = scmp.eq.s32.totalorder %s36, 0
      %p89 = por %p87, %p88
      %s91 = sadd.s32 %s90, 1
      %p94 = scmp.eq.s32.totalorder %s30, 1
      %p95 = scmp.ne.s32.totalorder %s90, %s92
      %p96 = scmp.eq.s32.totalorder %s30, 0
      %p97 = por %p95, %p96
      %p98 = scmp.ne.s32.totalorder %s90, %s92
      %p99 = scmp.eq.s32.totalorder %s35, 1
      %p100 = por %p98, %p99
      %p101 = scmp.ne.s32.totalorder %s92, %s93
      %p102 = scmp.eq.s32.totalorder %s35, 0
      %p103 = por %p101, %p102
      %p104 = scmp.ne.s32.totalorder %s92, %s93
      %p105 = scmp.eq.s32.totalorder %s36, 1
      %p106 = por %p104, %p105
      %p108 = scmp.ne.s32.totalorder %s93, %s107
      %p109 = scmp.eq.s32.totalorder %s36, 0
      %p110 = por %p108, %p109
      %s112 = sadd.s32 %s111, 1
      %p115 = scmp.eq.s32.totalorder %s30, 1
      %p116 = scmp.ne.s32.totalorder %s111, %s113
      %p117 = scmp.eq.s32.totalorder %s30, 0
      %p118 = por %p116, %p117
      %p119 = scmp.ne.s32.totalorder %s111, %s113
      %p120 = scmp.eq.s32.totalorder %s35, 1
      %p121 = por %p119, %p120
      %p122 = scmp.ne.s32.totalorder %s113, %s114
      %p123 = scmp.eq.s32.totalorder %s35, 0
      %p124 = por %p122, %p123
      %p125 = scmp.ne.s32.totalorder %s113, %s114
      %p126 = scmp.eq.s32.totalorder %s36, 1
      %p127 = por %p125, %p126
      %p129 = scmp.ne.s32.totalorder %s114, %s128
      %p130 = scmp.eq.s32.totalorder %s36, 0
      %p131 = por %p129, %p130
      %s133 = sadd.s32 %s132, 1
      %p136 = scmp.eq.s32.totalorder %s30, 1
      %p137 = scmp.ne.s32.totalorder %s132, %s134
      %p138 = scmp.eq.s32.totalorder %s30, 0
      %p139 = por %p137, %p138
      %p140 = scmp.ne.s32.totalorder %s132, %s134
      %p141 = scmp.eq.s32.totalorder %s35, 1
      %p142 = por %p140, %p141
      %p143 = scmp.ne.s32.totalorder %s134, %s135
      %p144 = scmp.eq.s32.totalorder %s35, 0
      %p145 = por %p143, %p144
      %p146 = scmp.ne.s32.totalorder %s134, %s135
      %p147 = scmp.eq.s32.totalorder %s36, 1
      %p148 = por %p146, %p147
      %p150 = scmp.ne.s32.totalorder %s135, %s149
      %p151 = scmp.eq.s32.totalorder %s36, 0
      %p152 = por %p150, %p151
      %s154 = sadd.s32 %s153, 1
      %p157 = scmp.eq.s32.totalorder %s30, 1
      %p158 = scmp.ne.s32.totalorder %s153, %s155
      %p159 = scmp.eq.s32.totalorder %s30, 0
      %p160 = por %p158, %p159
      %p161 = scmp.ne.s32.totalorder %s153, %s155
      %p162 = scmp.eq.s32.totalorder %s35, 1
      %p163 = por %p161, %p162
      %p164 = scmp.ne.s32.totalorder %s155, %s156
      %p165 = scmp.eq.s32.totalorder %s35, 0
      %p166 = por %p164, %p165
      %p167 = scmp.ne.s32.totalorder %s155, %s156
      %p168 = scmp.eq.s32.totalorder %s36, 1
      %p169 = por %p167, %p168
      %p171 = scmp.ne.s32.totalorder %s156, %s170
      %p172 = scmp.eq.s32.totalorder %s36, 0
      %p173 = por %p171, %p172
      %s175 = sadd.s32 %s174, 1
      %p178 = scmp.eq.s32.totalorder %s30, 1
      %p179 = scmp.ne.s32.totalorder %s174, %s176
      %p180 = scmp.eq.s32.totalorder %s30, 0
      %p181 = por %p179, %p180
      %p182 = scmp.ne.s32.totalorder %s174, %s176
      %p183 = scmp.eq.s32.totalorder %s35, 1
      %p184 = por %p182, %p183
      %p185 = scmp.ne.s32.totalorder %s176, %s177
      %p186 = scmp.eq.s32.totalorder %s35, 0
      %p187 = por %p185, %p186
      %p188 = scmp.ne.s32.totalorder %s176, %s177
      %p189 = scmp.eq.s32.totalorder %s36, 1
      %p190 = por %p188, %p189
      %p192 = scmp.ne.s32.totalorder %s177, %s191
      %p193 = scmp.eq.s32.totalorder %s36, 0
      %p194 = por %p192, %p193
      %s196 = sadd.s32 %s195, 1
      %p199 = scmp.eq.s32.totalorder %s30, 1
      %p200 = scmp.ne.s32.totalorder %s195, %s197
      %p201 = scmp.eq.s32.totalorder %s30, 0
      %p202 = por %p200, %p201
      %p203 = scmp.ne.s32.totalorder %s195, %s197
      %p204 = scmp.eq.s32.totalorder %s35, 1
      %p205 = por %p203, %p204
      %p206 = scmp.ne.s32.totalorder %s197, %s198
      %p207 = scmp.eq.s32.totalorder %s35, 0
      %p208 = por %p206, %p207
      %p209 = scmp.ne.s32.totalorder %s197, %s198
      %p210 = scmp.eq.s32.totalorder %s36, 1
      %p211 = por %p209, %p210
      %p213 = scmp.ne.s32.totalorder %s198, %s212
      %p214 = scmp.eq.s32.totalorder %s36, 0
      %p215 = por %p213, %p214
      %s216 = ssub.s32 %s30, %s37
      %p217 = scmp.eq.s32.totalorder %s216, 0
      %s219 = sadd.s32 %s218, 1
      %s220 = scalar_select %p217, %s218, %s219
      %p223 = pneg %p217
      %p224 = scmp.eq.s32.totalorder %s30, 1
      %p225 = por %p223, %p224
      %p226 = scmp.ne.s32.totalorder %s218, %s221
      %p227 = scmp.eq.s32.totalorder %s30, 0
      %p228 = por %p226, %p227
      %p229 = scmp.ne.s32.totalorder %s218, %s221
      %p230 = scmp.eq.s32.totalorder %s35, 1
      %p231 = por %p229, %p230
      %p232 = scmp.ne.s32.totalorder %s221, %s222
      %p233 = scmp.eq.s32.totalorder %s35, 0
      %p234 = por %p232, %p233
      %p235 = scmp.ne.s32.totalorder %s221, %s222
      %p236 = scmp.eq.s32.totalorder %s36, 1
      %p237 = por %p235, %p236
      %p239 = scmp.ne.s32.totalorder %s222, %s238
      %p240 = scmp.eq.s32.totalorder %s36, 0
      %p241 = por %p239, %p240
      %s242 = ssub.s32 %s30, %s37
      %p243 = scmp.eq.s32.totalorder %s242, 0
      %s245 = sadd.s32 %s244, 1
      %s246 = scalar_select %p243, %s244, %s245
      %p249 = pneg %p243
      %p250 = scmp.eq.s32.totalorder %s30, 1
      %p251 = por %p249, %p250
      %p252 = scmp.ne.s32.totalorder %s244, %s247
      %p253 = scmp.eq.s32.totalorder %s30, 0
      %p254 = por %p252, %p253
      %p255 = scmp.ne.s32.totalorder %s244, %s247
      %p256 = scmp.eq.s32.totalorder %s35, 1
      %p257 = por %p255, %p256
      %p258 = scmp.ne.s32.totalorder %s247, %s248
      %p259 = scmp.eq.s32.totalorder %s35, 0
      %p260 = por %p258, %p259
      %p261 = scmp.ne.s32.totalorder %s247, %s248
      %p262 = scmp.eq.s32.totalorder %s36, 1
      %p263 = por %p261, %p262
      %p265 = scmp.ne.s32.totalorder %s248, %s264
      %p266 = scmp.eq.s32.totalorder %s36, 0
      %p267 = por %p265, %p266
      %p268 = scmp.le.s32.totalorder 1, %s30
      %p269 = scmp.lt.s32.totalorder %s30, 3
      %p270 = pnand %p268, %p269
      %p271 = pneg %p270
      // Predicated region
      $region9: #{tpu_custom_call.1} parent=5 // pred_check
        _
      $region10: #{tpu_custom_call.1} parent=5 // pred_check_branch
        %273 = sbr.rel (%p270) target = $region12
      $region11: #{tpu_custom_call.1} parent=5 // pred_region
        %s274 = ssub.s32 %s30, 1
        // Predicated region
        $region13: #{tpu_custom_call.1} parent=11 // pred_check
          %p275 = pneg %p103
        $region14: #{tpu_custom_call.1} parent=11 // pred_check_branch
          %277 = sbr.rel (%p275) target = $region16
        $region15: #{tpu_custom_call.1} parent=11 // pred_region
          %279 = vsyncadd [#allocation7], 0
          %s280 = sshll.u32 %s2, 4
          %s281 = int_to_ptr.hbm [resolvable:$true] %s280
          %s282 = sshll.u32 [#allocation8], 4
          %s283 = int_to_ptr.vmem [resolvable:$true] %s282
          %288 = dma.hbm_to_vmem [thread:$0]  %s281, 4096, %s283, [#allocation7], 256, 256, 16
        $region16: #{tpu_custom_call.1} parent=11 // pred_fallthru
          _
        // Predicated region
        $region17: #{tpu_custom_call.1} parent=11 // pred_check
          %p289 = pneg %p124
        $region18: #{tpu_custom_call.1} parent=11 // pred_check_branch
          %291 = sbr.rel (%p289) target = $region20
        $region19: #{tpu_custom_call.1} parent=11 // pred_region
          %293 = vsyncadd [#allocation10], 0
          %s294 = sshll.u32 %s3, 4
          %s295 = int_to_ptr.hbm [resolvable:$true] %s294
          %s296 = sshll.u32 [#allocation9], 4
          %s297 = int_to_ptr.vmem [resolvable:$true] %s296
          %302 = dma.hbm_to_vmem [thread:$0]  %s295, 2048, %s297, [#allocation10], 128, 128, 8
        $region20: #{tpu_custom_call.1} parent=11 // pred_fallthru
          _
        // Predicated region
        $region21: #{tpu_custom_call.1} parent=11 // pred_check
          %p303 = pneg %p145
        $region22: #{tpu_custom_call.1} parent=11 // pred_check_branch
          %305 = sbr.rel (%p303) target = $region24
        $region23: #{tpu_custom_call.1} parent=11 // pred_region
          %307 = vsyncadd [#allocation10], 0
          %s308 = sshll.u32 %s4, 4
          %s309 = int_to_ptr.hbm [resolvable:$true] %s308
          %s310 = sshll.u32 [#allocation11], 4
          %s311 = int_to_ptr.vmem [resolvable:$true] %s310
          %316 = dma.hbm_to_vmem [thread:$0]  %s309, 2048, %s311, [#allocation10], 128, 128, 8
        $region24: #{tpu_custom_call.1} parent=11 // pred_fallthru
          _
        // Predicated region
        $region25: #{tpu_custom_call.1} parent=11 // pred_check
          %p317 = pneg %p166
        $region26: #{tpu_custom_call.1} parent=11 // pred_check_branch
          %319 = sbr.rel (%p317) target = $region28
        $region27: #{tpu_custom_call.1} parent=11 // pred_region
          _
        $region28: #{tpu_custom_call.1} parent=11 // pred_fallthru
          _
        // Predicated region
        $region29: #{tpu_custom_call.1} parent=11 // pred_check
          %p320 = pneg %p187
        $region30: #{tpu_custom_call.1} parent=11 // pred_check_branch
          %322 = sbr.rel (%p320) target = $region32
        $region31: #{tpu_custom_call.1} parent=11 // pred_region
          %324 = vsyncadd [#allocation13], 0
          %s325 = sshll.u32 %s6, 4
          %s326 = int_to_ptr.hbm [resolvable:$true] %s325
          %s327 = sshll.u32 [#allocation12], 4
          %s328 = int_to_ptr.vmem [resolvable:$true] %s327
          %333 = dma.hbm_to_vmem [thread:$0]  %s326, 6144, %s328, [#allocation13], 384, 384, 24
        $region32: #{tpu_custom_call.1} parent=11 // pred_fallthru
          _
        // Predicated region
        $region33: #{tpu_custom_call.1} parent=11 // pred_check
          %p334 = pneg %p208
        $region34: #{tpu_custom_call.1} parent=11 // pred_check_branch
          %336 = sbr.rel (%p334) target = $region36
        $region35: #{tpu_custom_call.1} parent=11 // pred_region
          _
        $region36: #{tpu_custom_call.1} parent=11 // pred_fallthru
          _
      $region12: #{tpu_custom_call.1} parent=5 // pred_fallthru
        _
      %p337 = scmp.lt.s32.totalorder %s30, 2
      // Predicated region
      $region37: #{tpu_custom_call.1} parent=5 // pred_check
        %p338 = pneg %p337
      $region38: #{tpu_custom_call.1} parent=5 // pred_check_branch
        %340 = sbr.rel (%p338) target = $region40
      $region39: #{tpu_custom_call.1} parent=5 // pred_region
        // Predicated region
        $region41: #{tpu_custom_call.1} parent=39 // pred_check
          %p341 = pneg %p50
        $region42: #{tpu_custom_call.1} parent=39 // pred_check_branch
          %343 = sbr.rel (%p341) target = $region44
        $region43: #{tpu_custom_call.1} parent=39 // pred_region
          %s344 = sand.u32 %s40, 1
          %s345 = scalar_lea.sflag [#allocation4], %s344
          %s346 = sand.u32 %s40, 1
          %s347 = smul.addr %s346, 8
          %s348 = scalar_lea.vmem [#allocation3], %s347
          %350 = vsyncadd %s345, 0
          %s351 = smul.addr %s30, 8
          %s352 = scalar_lea.hbm %s0, %s351
          %s354 = sshll.u32 %s352, 4
          %s355 = int_to_ptr.hbm [resolvable:$true] %s354
          %s356 = sshll.u32 %s348, 4
          %s357 = int_to_ptr.vmem [resolvable:$true] %s356
          %359 = dma.hbm_to_vmem [thread:$0]  %s355, 128, %s357, %s345
        $region44: #{tpu_custom_call.1} parent=39 // pred_fallthru
          _
        // Predicated region
        $region45: #{tpu_custom_call.1} parent=39 // pred_check
          %p360 = pneg %p76
        $region46: #{tpu_custom_call.1} parent=39 // pred_check_branch
          %362 = sbr.rel (%p360) target = $region48
        $region47: #{tpu_custom_call.1} parent=39 // pred_region
          %s363 = sand.u32 %s30, 1
          %s364 = scalar_lea.sflag [#allocation7], %s363
          %s365 = sand.u32 %s66, 1
          %s366 = smul.addr %s365, 24
          %s367 = scalar_lea.vmem [#allocation6], %s366
          %369 = vsyncadd %s364, 0
          %s370 = smul.addr %s30, 3
          %s371 = smul.addr %s370, 8
          %s372 = scalar_lea.hbm %s1, %s371
          %s374 = sshll.u32 %s372, 4
          %s375 = int_to_ptr.hbm [resolvable:$true] %s374
          %s376 = sshll.u32 %s367, 4
          %s377 = int_to_ptr.vmem [resolvable:$true] %s376
          %379 = dma.hbm_to_vmem [thread:$0]  %s375, 384, %s377, %s364
        $region48: #{tpu_custom_call.1} parent=39 // pred_fallthru
          _
      $region40: #{tpu_custom_call.1} parent=5 // pred_fallthru
        _
      %p380 = scmp.le.s32.totalorder 1, %s30
      %p381 = scmp.lt.s32.totalorder %s30, 3
      %p382 = pnand %p380, %p381
      %p383 = pneg %p382
      // Predicated region
      $region49: #{tpu_custom_call.1} parent=5 // pred_check
        _
      $region50: #{tpu_custom_call.1} parent=5 // pred_check_branch
        %385 = sbr.rel (%p382) target = $region52
      $region51: #{tpu_custom_call.1} parent=5 // pred_region
        %s386 = ssub.s32 %s30, 1
        %s387 = sand.u32 %s43, 1
        %s388 = scalar_lea.sflag [#allocation4], %s387
        %s389 = sand.u32 %s43, 1
        %s390 = smul.addr %s389, 8
        %s391 = scalar_lea.vmem [#allocation3], %s390
        // Predicated region
        $region53: #{tpu_custom_call.1} parent=51 // pred_check
          %p392 = pneg %p56
        $region54: #{tpu_custom_call.1} parent=51 // pred_check_branch
          %394 = sbr.rel (%p392) target = $region56
        $region55: #{tpu_custom_call.1} parent=51 // pred_region
          %396 = dma.done %s388, 128
        $region56: #{tpu_custom_call.1} parent=51 // pred_fallthru
          _
        %s397 = sand.u32 %s35, 1
        %s398 = scalar_lea.sflag [#allocation7], %s397
        %s399 = sand.u32 %s69, 1
        %s400 = smul.addr %s399, 24
        %s401 = scalar_lea.vmem [#allocation6], %s400
        // Predicated region
        $region57: #{tpu_custom_call.1} parent=51 // pred_check
          %p402 = pneg %p82
        $region58: #{tpu_custom_call.1} parent=51 // pred_check_branch
          %404 = sbr.rel (%p402) target = $region60
        $region59: #{tpu_custom_call.1} parent=51 // pred_region
          %406 = dma.done %s398, 384
        $region60: #{tpu_custom_call.1} parent=51 // pred_fallthru
          _
        // Predicated region
        $region61: #{tpu_custom_call.1} parent=51 // pred_check
          %p407 = pneg %p103
        $region62: #{tpu_custom_call.1} parent=51 // pred_check_branch
          %409 = sbr.rel (%p407) target = $region64
        $region63: #{tpu_custom_call.1} parent=51 // pred_region
          %411 = dma.done [#allocation7], 4096
        $region64: #{tpu_custom_call.1} parent=51 // pred_fallthru
          _
        // Predicated region
        $region65: #{tpu_custom_call.1} parent=51 // pred_check
          %p412 = pneg %p124
        $region66: #{tpu_custom_call.1} parent=51 // pred_check_branch
          %414 = sbr.rel (%p412) target = $region68
        $region67: #{tpu_custom_call.1} parent=51 // pred_region
          %416 = dma.done [#allocation10], 2048
        $region68: #{tpu_custom_call.1} parent=51 // pred_fallthru
          _
        // Predicated region
        $region69: #{tpu_custom_call.1} parent=51 // pred_check
          %p417 = pneg %p145
        $region70: #{tpu_custom_call.1} parent=51 // pred_check_branch
          %419 = sbr.rel (%p417) target = $region72
        $region71: #{tpu_custom_call.1} parent=51 // pred_region
          %421 = dma.done [#allocation10], 2048
        $region72: #{tpu_custom_call.1} parent=51 // pred_fallthru
          _
        // Predicated region
        $region73: #{tpu_custom_call.1} parent=51 // pred_check
          %p422 = pneg %p187
        $region74: #{tpu_custom_call.1} parent=51 // pred_check_branch
          %424 = sbr.rel (%p422) target = $region76
        $region75: #{tpu_custom_call.1} parent=51 // pred_region
          %426 = dma.done [#allocation13], 6144
        $region76: #{tpu_custom_call.1} parent=51 // pred_fallthru
          _
        %s427 = sand.u32 %s43, 1
        %s428 = scalar_lea.sflag [#allocation4], %s427
        %s429 = sand.u32 %s43, 1
        %s430 = smul.addr %s429, 8
        %s431 = scalar_lea.vmem [#allocation3], %s430
        %p432 = pneg %p56
        %p433 = pneg %p53
        %s434 = sand.u32 %s35, 1
        %s435 = scalar_lea.sflag [#allocation7], %s434
        %s436 = sand.u32 %s69, 1
        %s437 = smul.addr %s436, 24
        %s438 = scalar_lea.vmem [#allocation6], %s437
        %p439 = pneg %p82
        %p440 = pneg %p79
        %p441 = pneg %p103
        %p442 = pneg %p100
        %p443 = pneg %p124
        %p444 = pneg %p121
        %p445 = pneg %p145
        %p446 = pneg %p142
        %p447 = pneg %p166
        %p448 = pneg %p163
        %p449 = pneg %p187
        %p450 = pneg %p184
        %p451 = pneg %p208
        %p452 = pneg %p205
        %p453 = pneg %p234
        %p454 = pneg %p231
        %s455 = sand.u32 %s221, 1
        %s456 = scalar_lea.sflag [#allocation5], %s455
        %s457 = sand.u32 %s221, 1
        %s458 = smul.addr %s457, 8
        %s459 = scalar_lea.vmem [#allocation14], %s458
        %p460 = pneg %p260
        %p461 = pneg %p257
        %s462 = sand.u32 %s247, 1
        %s463 = scalar_lea.sflag [#allocation16], %s462
        %s464 = sand.u32 %s247, 1
        %s465 = smul.addr %s464, 24
        %s466 = scalar_lea.vmem [#allocation15], %s465
        %v467 = vld [vmem:[#allocation8] sm:$0xff]
        %v468 = vld [vmem:[#allocation8 + $0x8] sm:$0xff]
        %v469 = vld [vmem:[#allocation8 + $0x10] sm:$0xff]
        %v470 = vld [vmem:[#allocation8 + $0x18] sm:$0xff]
        %v471 = vld [vmem:[#allocation8 + $0x20] sm:$0xff]
        %v472 = vld [vmem:[#allocation8 + $0x28] sm:$0xff]
        %v473 = vld [vmem:[#allocation8 + $0x30] sm:$0xff]
        %v474 = vld [vmem:[#allocation8 + $0x38] sm:$0xff]
        %v475 = vld [vmem:[#allocation8 + $0x40] sm:$0xff]
        %v476 = vld [vmem:[#allocation8 + $0x48] sm:$0xff]
        %v477 = vld [vmem:[#allocation8 + $0x50] sm:$0xff]
        %v478 = vld [vmem:[#allocation8 + $0x58] sm:$0xff]
        %v479 = vld [vmem:[#allocation8 + $0x60] sm:$0xff]
        %v480 = vld [vmem:[#allocation8 + $0x68] sm:$0xff]
        %v481 = vld [vmem:[#allocation8 + $0x70] sm:$0xff]
        %v482 = vld [vmem:[#allocation8 + $0x78] sm:$0xff]
        %v483 = vld [vmem:[#allocation8 + $0x80] sm:$0xff]
        %v484 = vld [vmem:[#allocation8 + $0x88] sm:$0xff]
        %v485 = vld [vmem:[#allocation8 + $0x90] sm:$0xff]
        %v486 = vld [vmem:[#allocation8 + $0x98] sm:$0xff]
        %v487 = vld [vmem:[#allocation8 + $0xa0] sm:$0xff]
        %v488 = vld [vmem:[#allocation8 + $0xa8] sm:$0xff]
        %v489 = vld [vmem:[#allocation8 + $0xb0] sm:$0xff]
        %v490 = vld [vmem:[#allocation8 + $0xb8] sm:$0xff]
        %v491 = vld [vmem:[#allocation8 + $0xc0] sm:$0xff]
        %v492 = vld [vmem:[#allocation8 + $0xc8] sm:$0xff]
        %v493 = vld [vmem:[#allocation8 + $0xd0] sm:$0xff]
        %v494 = vld [vmem:[#allocation8 + $0xd8] sm:$0xff]
        %v495 = vld [vmem:[#allocation8 + $0xe0] sm:$0xff]
        %v496 = vld [vmem:[#allocation8 + $0xe8] sm:$0xff]
        %v497 = vld [vmem:[#allocation8 + $0xf0] sm:$0xff]
        %v498 = vld [vmem:[#allocation8 + $0xf8] sm:$0xff]
        %v499 = vld [vmem:[%s401] sm:$0xff]
        %500 = vmatpush.msra.mxu0 %v497
        %501 = vmatpush.msra.mxu0 %v495
        %502 = vmatpush.msra.mxu0 %v493
        %503 = vmatpush.msra.mxu0 %v491
        %504 = vmatpush.msra.mxu0 %v489
        %505 = vmatpush.msra.mxu0 %v487
        %506 = vmatpush.msra.mxu0 %v485
        %507 = vmatpush.msra.mxu0 %v483
        %508 = vmatpush.msra.mxu0 %v481
        %509 = vmatpush.msra.mxu0 %v479
        %510 = vmatpush.msra.mxu0 %v477
        %511 = vmatpush.msra.mxu0 %v475
        %512 = vmatpush.msra.mxu0 %v473
        %513 = vmatpush.msra.mxu0 %v471
        %514 = vmatpush.msra.mxu0 %v469
        %515 = vmatpush.msra.mxu0 %v467
        %516 = vmatmul.f32.gmra.mxu0 %v499
        %v517 = vpop.f32.mrf.mxu0
        %v518 = vadd.f32 0.0, %v517
        %519 = vdwg.mxu0
        %520 = vmatpush.msra.mxu0 %v498
        %521 = vmatpush.msra.mxu0 %v496
        %522 = vmatpush.msra.mxu0 %v494
        %523 = vmatpush.msra.mxu0 %v492
        %524 = vmatpush.msra.mxu0 %v490
        %525 = vmatpush.msra.mxu0 %v488
        %526 = vmatpush.msra.mxu0 %v486
        %527 = vmatpush.msra.mxu0 %v484
        %528 = vmatpush.msra.mxu0 %v482
        %529 = vmatpush.msra.mxu0 %v480
        %530 = vmatpush.msra.mxu0 %v478
        %531 = vmatpush.msra.mxu0 %v476
        %532 = vmatpush.msra.mxu0 %v474
        %533 = vmatpush.msra.mxu0 %v472
        %534 = vmatpush.msra.mxu0 %v470
        %535 = vmatpush.msra.mxu0 %v468
        %536 = vmatmul.f32.gmra.mxu0 %v499
        %v537 = vpop.f32.mrf.mxu0
        %v538 = vadd.f32 0.0, %v537
        %539 = vdwg.mxu0
        %540 = vst [vmem:[#allocation2] sm:$0xff] %v538
        %v541 = vmul.f32 %v518, %v518
        %v542 = vadd.f32 %v541, 0.0
        %v543 = vmul.f32 %v518, %v538
        %v544 = vadd.f32 %v543, 0.0
        %v545 = vld [vmem:[%s401 + $0x8] sm:$0xff]
        %546 = vmatpush.msra.mxu0 %v497
        %547 = vmatpush.msra.mxu0 %v495
        %548 = vmatpush.msra.mxu0 %v493
        %549 = vmatpush.msra.mxu0 %v491
        %550 = vmatpush.msra.mxu0 %v489
        %551 = vmatpush.msra.mxu0 %v487
        %552 = vmatpush.msra.mxu0 %v485
        %553 = vmatpush.msra.mxu0 %v483
        %554 = vmatpush.msra.mxu0 %v481
        %555 = vmatpush.msra.mxu0 %v479
        %556 = vmatpush.msra.mxu0 %v477
        %557 = vmatpush.msra.mxu0 %v475
        %558 = vmatpush.msra.mxu0 %v473
        %559 = vmatpush.msra.mxu0 %v471
        %560 = vmatpush.msra.mxu0 %v469
        %561 = vmatpush.msra.mxu0 %v467
        %562 = vmatmul.f32.gmra.mxu0 %v545
        %v563 = vpop.f32.mrf.mxu0
        %v564 = vadd.f32 0.0, %v563
        %565 = vdwg.mxu0
        %566 = vmatpush.msra.mxu0 %v498
        %567 = vmatpush.msra.mxu0 %v496
        %568 = vmatpush.msra.mxu0 %v494
        %569 = vmatpush.msra.mxu0 %v492
        %570 = vmatpush.msra.mxu0 %v490
        %571 = vmatpush.msra.mxu0 %v488
        %572 = vmatpush.msra.mxu0 %v486
        %573 = vmatpush.msra.mxu0 %v484
        %574 = vmatpush.msra.mxu0 %v482
        %575 = vmatpush.msra.mxu0 %v480
        %576 = vmatpush.msra.mxu0 %v478
        %577 = vmatpush.msra.mxu0 %v476
        %578 = vmatpush.msra.mxu0 %v474
        %579 = vmatpush.msra.mxu0 %v472
        %580 = vmatpush.msra.mxu0 %v470
        %581 = vmatpush.msra.mxu0 %v468
        %582 = vmatmul.f32.gmra.mxu0 %v545
        %v583 = vpop.f32.mrf.mxu0
        %v584 = vadd.f32 0.0, %v583
        %585 = vdwg.mxu0
        %586 = vst [vmem:[#allocation2 + $0x8] sm:$0xff] %v584
        %v587 = vmul.f32 %v564, %v564
        %v588 = vadd.f32 %v542, %v587
        %v589 = vmul.f32 %v564, %v584
        %v590 = vadd.f32 %v544, %v589
        %v591 = vld [vmem:[%s401 + $0x10] sm:$0xff]
        %592 = vmatpush.msra.mxu0 %v497
        %593 = vmatpush.msra.mxu0 %v495
        %594 = vmatpush.msra.mxu0 %v493
        %595 = vmatpush.msra.mxu0 %v491
        %596 = vmatpush.msra.mxu0 %v489
        %597 = vmatpush.msra.mxu0 %v487
        %598 = vmatpush.msra.mxu0 %v485
        %599 = vmatpush.msra.mxu0 %v483
        %600 = vmatpush.msra.mxu0 %v481
        %601 = vmatpush.msra.mxu0 %v479
        %602 = vmatpush.msra.mxu0 %v477
        %603 = vmatpush.msra.mxu0 %v475
        %604 = vmatpush.msra.mxu0 %v473
        %605 = vmatpush.msra.mxu0 %v471
        %606 = vmatpush.msra.mxu0 %v469
        %607 = vmatpush.msra.mxu0 %v467
        %608 = vmatmul.f32.gmra.mxu0 %v591
        %v609 = vpop.f32.mrf.mxu0
        %v610 = vadd.f32 0.0, %v609
        %611 = vdwg.mxu0
        %612 = vmatpush.msra.mxu0 %v498
        %613 = vmatpush.msra.mxu0 %v496
        %614 = vmatpush.msra.mxu0 %v494
        %615 = vmatpush.msra.mxu0 %v492
        %616 = vmatpush.msra.mxu0 %v490
        %617 = vmatpush.msra.mxu0 %v488
        %618 = vmatpush.msra.mxu0 %v486
        %619 = vmatpush.msra.mxu0 %v484
        %620 = vmatpush.msra.mxu0 %v482
        %621 = vmatpush.msra.mxu0 %v480
        %622 = vmatpush.msra.mxu0 %v478
        %623 = vmatpush.msra.mxu0 %v476
        %624 = vmatpush.msra.mxu0 %v474
        %625 = vmatpush.msra.mxu0 %v472
        %626 = vmatpush.msra.mxu0 %v470
        %627 = vmatpush.msra.mxu0 %v468
        %628 = vmatmul.f32.gmra.mxu0 %v591
        %v629 = vpop.f32.mrf.mxu0
        %v630 = vadd.f32 0.0, %v629
        %631 = vdwg.mxu0
        %632 = vst [vmem:[#allocation2 + $0x10] sm:$0xff] %v630
        %v633 = vmul.f32 %v610, %v610
        %v634 = vadd.f32 %v588, %v633
        %v635 = vmul.f32 %v610, %v630
        %v636 = vadd.f32 %v590, %v635
        %v637 = vadd.f32 %v634, 1e-08
        %v638 = vrsqrt.pop %v637
        %v639 = vmul.f32 %v638, %v637
        %v640 = vmul.f32 %v639, %v638
        %v641 = vmul.f32 0.5, %v640
        %v642 = vsub.f32 1.5, %v641
        %v643 = vmul.f32 %v638, %v642
        %v644 = vmul.f32 %v637, %v643
        %vm645 = vcmp.eq.f32.partialorder %v637, inf
        %v646 = vsel %vm645, %v637, %v644
        %vm647 = vcmp.eq.f32.partialorder %v637, 0.0
        %v648 = vand.u32 %v637, 2147483648
        %v649 = vsel %vm647, %v648, %v646
        %v650 = vld [vmem:[%s391] sm:$0xff]
        %v651 = vld [vmem:[#allocation9] sm:$0xff]
        %v652 = vld [vmem:[#allocation9 + $0x8] sm:$0xff]
        %v653 = vld [vmem:[#allocation9 + $0x10] sm:$0xff]
        %v654 = vld [vmem:[#allocation9 + $0x18] sm:$0xff]
        %v655 = vld [vmem:[#allocation9 + $0x20] sm:$0xff]
        %v656 = vld [vmem:[#allocation9 + $0x28] sm:$0xff]
        %v657 = vld [vmem:[#allocation9 + $0x30] sm:$0xff]
        %v658 = vld [vmem:[#allocation9 + $0x38] sm:$0xff]
        %v659 = vld [vmem:[#allocation9 + $0x40] sm:$0xff]
        %v660 = vld [vmem:[#allocation9 + $0x48] sm:$0xff]
        %v661 = vld [vmem:[#allocation9 + $0x50] sm:$0xff]
        %v662 = vld [vmem:[#allocation9 + $0x58] sm:$0xff]
        %v663 = vld [vmem:[#allocation9 + $0x60] sm:$0xff]
        %v664 = vld [vmem:[#allocation9 + $0x68] sm:$0xff]
        %v665 = vld [vmem:[#allocation9 + $0x70] sm:$0xff]
        %v666 = vld [vmem:[#allocation9 + $0x78] sm:$0xff]
        %v667 = vld [vmem:[#allocation11] sm:$0xff]
        %v668 = vld [vmem:[#allocation11 + $0x8] sm:$0xff]
        %v669 = vld [vmem:[#allocation11 + $0x10] sm:$0xff]
        %v670 = vld [vmem:[#allocation11 + $0x18] sm:$0xff]
        %v671 = vld [vmem:[#allocation11 + $0x20] sm:$0xff]
        %v672 = vld [vmem:[#allocation11 + $0x28] sm:$0xff]
        %v673 = vld [vmem:[#allocation11 + $0x30] sm:$0xff]
        %v674 = vld [vmem:[#allocation11 + $0x38] sm:$0xff]
        %v675 = vld [vmem:[#allocation11 + $0x40] sm:$0xff]
        %v676 = vld [vmem:[#allocation11 + $0x48] sm:$0xff]
        %v677 = vld [vmem:[#allocation11 + $0x50] sm:$0xff]
        %v678 = vld [vmem:[#allocation11 + $0x58] sm:$0xff]
        %v679 = vld [vmem:[#allocation11 + $0x60] sm:$0xff]
        %v680 = vld [vmem:[#allocation11 + $0x68] sm:$0xff]
        %v681 = vld [vmem:[#allocation11 + $0x70] sm:$0xff]
        %v682 = vld [vmem:[#allocation11 + $0x78] sm:$0xff]
        %683 = vmatpush.msra.mxu0 %v682
        %684 = vmatpush.msra.mxu0 %v681
        %685 = vmatpush.msra.mxu0 %v680
        %686 = vmatpush.msra.mxu0 %v679
        %687 = vmatpush.msra.mxu0 %v678
        %688 = vmatpush.msra.mxu0 %v677
        %689 = vmatpush.msra.mxu0 %v676
        %690 = vmatpush.msra.mxu0 %v675
        %691 = vmatpush.msra.mxu0 %v674
        %692 = vmatpush.msra.mxu0 %v673
        %693 = vmatpush.msra.mxu0 %v672
        %694 = vmatpush.msra.mxu0 %v671
        %695 = vmatpush.msra.mxu0 %v670
        %696 = vmatpush.msra.mxu0 %v669
        %697 = vmatpush.msra.mxu0 %v668
        %698 = vmatpush.msra.mxu0 %v667
        %699 = vmatmul.f32.gmra.mxu0 %v649
        %v700 = vpop.f32.mrf.mxu0
        %v701 = vadd.f32 0.0, %v700
        %702 = vdwg.mxu0
        %703 = vmatpush.msra.mxu0 %v666
        %704 = vmatpush.msra.mxu0 %v665
        %705 = vmatpush.msra.mxu0 %v664
        %706 = vmatpush.msra.mxu0 %v663
        %707 = vmatpush.msra.mxu0 %v662
        %708 = vmatpush.msra.mxu0 %v661
        %709 = vmatpush.msra.mxu0 %v660
        %710 = vmatpush.msra.mxu0 %v659
        %711 = vmatpush.msra.mxu0 %v658
        %712 = vmatpush.msra.mxu0 %v657
        %713 = vmatpush.msra.mxu0 %v656
        %714 = vmatpush.msra.mxu0 %v655
        %715 = vmatpush.msra.mxu0 %v654
        %716 = vmatpush.msra.mxu0 %v653
        %717 = vmatpush.msra.mxu0 %v652
        %718 = vmatpush.msra.mxu0 %v651
        %719 = vmatmul.f32.gmra.mxu0 %v650
        %v720 = vpop.f32.mrf.mxu0
        %v721 = vadd.f32 %v701, %v720
        %722 = vdwg.mxu0
        %v723 = vld [vmem:[%s5] sm:$0x1]
        %v725 = vperm.slane %v723, 0
        %v727 = vadd.f32 %v721, %v725
        %v728 = vxor.u32 %v727, 2147483648
        %v729 = vmul.f32 %v728, 1.442695
        %v730 = vpow.pop %v729
        %v731 = vadd.f32 %v730, 1.0
        %v732 = vrcp.pop %v731
        %v733 = vmul.f32 %v731, %v732
        %v734 = vsub.f32 1.0, %v733
        %v735 = vmul.f32 %v732, %v734
        %v736 = vadd.f32 %v732, %v735
        %vm737 = vweird.f32 %v731
        %vm738 = vweird.f32 %v732
        %vm739 = vmor %vm737, %vm738
        %v740 = vsel %vm739, %v732, %v736
        %v741 = vand.u32 2147483647, %v731
        %vm742 = vcmp.eq.f32.partialorder %v741, 8.507059e+37
        %v743 = vand.u32 %v731, 2147483648
        %v744 = vor.u32 1.1754944e-38, %v743
        %v745 = vsel %vm742, %v744, %v740
        %v746 = vmul.f32 1.0, %v745
        %v747 = vmul.f32 %v727, %v746
        %v748 = vld [vmem:[#allocation12] sm:$0xff]
        %v749 = vld [vmem:[#allocation12 + $0x8] sm:$0xff]
        %v750 = vld [vmem:[#allocation12 + $0x10] sm:$0xff]
        %v751 = vld [vmem:[#allocation12 + $0x18] sm:$0xff]
        %v752 = vld [vmem:[#allocation12 + $0x20] sm:$0xff]
        %v753 = vld [vmem:[#allocation12 + $0x28] sm:$0xff]
        %v754 = vld [vmem:[#allocation12 + $0x30] sm:$0xff]
        %v755 = vld [vmem:[#allocation12 + $0x38] sm:$0xff]
        %v756 = vld [vmem:[#allocation12 + $0x40] sm:$0xff]
        %v757 = vld [vmem:[#allocation12 + $0x48] sm:$0xff]
        %v758 = vld [vmem:[#allocation12 + $0x50] sm:$0xff]
        %v759 = vld [vmem:[#allocation12 + $0x58] sm:$0xff]
        %v760 = vld [vmem:[#allocation12 + $0x60] sm:$0xff]
        %v761 = vld [vmem:[#allocation12 + $0x68] sm:$0xff]
        %v762 = vld [vmem:[#allocation12 + $0x70] sm:$0xff]
        %v763 = vld [vmem:[#allocation12 + $0x78] sm:$0xff]
        %v764 = vld [vmem:[#allocation12 + $0x80] sm:$0xff]
        %v765 = vld [vmem:[#allocation12 + $0x88] sm:$0xff]
        %v766 = vld [vmem:[#allocation12 + $0x90] sm:$0xff]
        %v767 = vld [vmem:[#allocation12 + $0x98] sm:$0xff]
        %v768 = vld [vmem:[#allocation12 + $0xa0] sm:$0xff]
        %v769 = vld [vmem:[#allocation12 + $0xa8] sm:$0xff]
        %v770 = vld [vmem:[#allocation12 + $0xb0] sm:$0xff]
        %v771 = vld [vmem:[#allocation12 + $0xb8] sm:$0xff]
        %v772 = vld [vmem:[#allocation12 + $0xc0] sm:$0xff]
        %v773 = vld [vmem:[#allocation12 + $0xc8] sm:$0xff]
        %v774 = vld [vmem:[#allocation12 + $0xd0] sm:$0xff]
        %v775 = vld [vmem:[#allocation12 + $0xd8] sm:$0xff]
        %v776 = vld [vmem:[#allocation12 + $0xe0] sm:$0xff]
        %v777 = vld [vmem:[#allocation12 + $0xe8] sm:$0xff]
        %v778 = vld [vmem:[#allocation12 + $0xf0] sm:$0xff]
        %v779 = vld [vmem:[#allocation12 + $0xf8] sm:$0xff]
        %v780 = vld [vmem:[#allocation12 + $0x100] sm:$0xff]
        %v781 = vld [vmem:[#allocation12 + $0x108] sm:$0xff]
        %v782 = vld [vmem:[#allocation12 + $0x110] sm:$0xff]
        %v783 = vld [vmem:[#allocation12 + $0x118] sm:$0xff]
        %v784 = vld [vmem:[#allocation12 + $0x120] sm:$0xff]
        %v785 = vld [vmem:[#allocation12 + $0x128] sm:$0xff]
        %v786 = vld [vmem:[#allocation12 + $0x130] sm:$0xff]
        %v787 = vld [vmem:[#allocation12 + $0x138] sm:$0xff]
        %v788 = vld [vmem:[#allocation12 + $0x140] sm:$0xff]
        %v789 = vld [vmem:[#allocation12 + $0x148] sm:$0xff]
        %v790 = vld [vmem:[#allocation12 + $0x150] sm:$0xff]
        %v791 = vld [vmem:[#allocation12 + $0x158] sm:$0xff]
        %v792 = vld [vmem:[#allocation12 + $0x160] sm:$0xff]
        %v793 = vld [vmem:[#allocation12 + $0x168] sm:$0xff]
        %v794 = vld [vmem:[#allocation12 + $0x170] sm:$0xff]
        %v795 = vld [vmem:[#allocation12 + $0x178] sm:$0xff]
        %v796 = vld [vmem:[%s7] sm:$0x7]
        %v798 = vperm.slane %v796, 0
        %v799 = vperm.slane %v796, 1
        %v800 = vperm.slane %v796, 2
        %804 = vmatpush.msra.mxu0 %v793
        %805 = vmatpush.msra.mxu0 %v790
        %806 = vmatpush.msra.mxu0 %v787
        %807 = vmatpush.msra.mxu0 %v784
        %808 = vmatpush.msra.mxu0 %v781
        %809 = vmatpush.msra.mxu0 %v778
        %810 = vmatpush.msra.mxu0 %v775
        %811 = vmatpush.msra.mxu0 %v772
        %812 = vmatpush.msra.mxu0 %v769
        %813 = vmatpush.msra.mxu0 %v766
        %814 = vmatpush.msra.mxu0 %v763
        %815 = vmatpush.msra.mxu0 %v760
        %816 = vmatpush.msra.mxu0 %v757
        %817 = vmatpush.msra.mxu0 %v754
        %818 = vmatpush.msra.mxu0 %v751
        %819 = vmatpush.msra.mxu0 %v748
        %820 = vmatmul.f32.gmra.mxu0 %v747
        %v821 = vpop.f32.mrf.mxu0
        %v822 = vadd.f32 %v798, %v821
        %823 = vdwg.mxu0
        %824 = vmatpush.msra.mxu0 %v794
        %825 = vmatpush.msra.mxu0 %v791
        %826 = vmatpush.msra.mxu0 %v788
        %827 = vmatpush.msra.mxu0 %v785
        %828 = vmatpush.msra.mxu0 %v782
        %829 = vmatpush.msra.mxu0 %v779
        %830 = vmatpush.msra.mxu0 %v776
        %831 = vmatpush.msra.mxu0 %v773
        %832 = vmatpush.msra.mxu0 %v770
        %833 = vmatpush.msra.mxu0 %v767
        %834 = vmatpush.msra.mxu0 %v764
        %835 = vmatpush.msra.mxu0 %v761
        %836 = vmatpush.msra.mxu0 %v758
        %837 = vmatpush.msra.mxu0 %v755
        %838 = vmatpush.msra.mxu0 %v752
        %839 = vmatpush.msra.mxu0 %v749
        %840 = vmatmul.f32.gmra.mxu0 %v747
        %v841 = vpop.f32.mrf.mxu0
        %v842 = vadd.f32 %v799, %v841
        %843 = vdwg.mxu0
        %844 = vmatpush.msra.mxu0 %v795
        %845 = vmatpush.msra.mxu0 %v792
        %846 = vmatpush.msra.mxu0 %v789
        %847 = vmatpush.msra.mxu0 %v786
        %848 = vmatpush.msra.mxu0 %v783
        %849 = vmatpush.msra.mxu0 %v780
        %850 = vmatpush.msra.mxu0 %v777
        %851 = vmatpush.msra.mxu0 %v774
        %852 = vmatpush.msra.mxu0 %v771
        %853 = vmatpush.msra.mxu0 %v768
        %854 = vmatpush.msra.mxu0 %v765
        %855 = vmatpush.msra.mxu0 %v762
        %856 = vmatpush.msra.mxu0 %v759
        %857 = vmatpush.msra.mxu0 %v756
        %858 = vmatpush.msra.mxu0 %v753
        %859 = vmatpush.msra.mxu0 %v750
        %860 = vmatmul.f32.gmra.mxu0 %v747
        %v861 = vpop.f32.mrf.mxu0
        %v862 = vadd.f32 %v800, %v861
        %863 = vdwg.mxu0
        %v864 = vadd.f32 %v650, %v822
        %v865 = vmul.f32 %v862, %v636
        %v866 = vadd.f32 %v864, %v865
        %867 = vst [vmem:[%s459] sm:$0xff] %v866
        %v868 = vld [vmem:[#allocation2] sm:$0xff]
        %v869 = vmul.f32 %v842, %v868
        %v870 = vld [vmem:[%s401] sm:$0xff]
        %v871 = vadd.f32 %v870, %v869
        %872 = vst [vmem:[%s466] sm:$0xff] %v871
        %v873 = vld [vmem:[#allocation2 + $0x8] sm:$0xff]
        %v874 = vmul.f32 %v842, %v873
        %v875 = vld [vmem:[%s401 + $0x8] sm:$0xff]
        %v876 = vadd.f32 %v875, %v874
        %877 = vst [vmem:[%s466 + $0x8] sm:$0xff] %v876
        %v878 = vld [vmem:[#allocation2 + $0x10] sm:$0xff]
        %v879 = vmul.f32 %v842, %v878
        %v880 = vld [vmem:[%s401 + $0x10] sm:$0xff]
        %v881 = vadd.f32 %v880, %v879
        %882 = vst [vmem:[%s466 + $0x10] sm:$0xff] %v881
        %s883 = sand.u32 %s221, 1
        %s884 = scalar_lea.sflag [#allocation5], %s883
        %s885 = sand.u32 %s221, 1
        %s886 = smul.addr %s885, 8
        %s887 = scalar_lea.vmem [#allocation14], %s886
        %s888 = sand.u32 %s247, 1
        %s889 = scalar_lea.sflag [#allocation16], %s888
        %s890 = sand.u32 %s247, 1
        %s891 = smul.addr %s890, 24
        %s892 = scalar_lea.vmem [#allocation15], %s891
        // Predicated region
        $region77: #{tpu_custom_call.1} parent=51 // pred_check
          %p893 = pneg %p231
        $region78: #{tpu_custom_call.1} parent=51 // pred_check_branch
          %895 = sbr.rel (%p893) target = $region80
        $region79: #{tpu_custom_call.1} parent=51 // pred_region
          %897 = vsyncadd %s884, 0
          %s898 = smul.addr %s35, 8
          %s899 = scalar_lea.hbm %s8, %s898
          %s901 = sshll.u32 %s887, 4
          %s902 = int_to_ptr.vmem [resolvable:$true] %s901
          %s903 = sshll.u32 %s899, 4
          %s904 = int_to_ptr.hbm [resolvable:$true] %s903
          %906 = dma.vmem_to_hbm [thread:$0]  %s902, 128, %s904, %s884
        $region80: #{tpu_custom_call.1} parent=51 // pred_fallthru
          _
        // Predicated region
        $region81: #{tpu_custom_call.1} parent=51 // pred_check
          %p907 = pneg %p257
        $region82: #{tpu_custom_call.1} parent=51 // pred_check_branch
          %909 = sbr.rel (%p907) target = $region84
        $region83: #{tpu_custom_call.1} parent=51 // pred_region
          %911 = vsyncadd %s889, 0
          %s912 = smul.addr %s35, 3
          %s913 = smul.addr %s912, 8
          %s914 = scalar_lea.hbm %s9, %s913
          %s916 = sshll.u32 %s892, 4
          %s917 = int_to_ptr.vmem [resolvable:$true] %s916
          %s918 = sshll.u32 %s914, 4
          %s919 = int_to_ptr.hbm [resolvable:$true] %s918
          %921 = dma.vmem_to_hbm [thread:$0]  %s917, 384, %s919, %s889
        $region84: #{tpu_custom_call.1} parent=51 // pred_fallthru
          _
      $region52: #{tpu_custom_call.1} parent=5 // pred_fallthru
        _
      %p922 = scmp.le.s32.totalorder 2, %s30
      // Predicated region
      $region85: #{tpu_custom_call.1} parent=5 // pred_check
        %p923 = pneg %p922
      $region86: #{tpu_custom_call.1} parent=5 // pred_check_branch
        %925 = sbr.rel (%p923) target = $region88
      $region87: #{tpu_custom_call.1} parent=5 // pred_region
        %s926 = ssub.s32 %s30, 2
        // Predicated region
        $region89: #{tpu_custom_call.1} parent=87 // pred_check
          %p927 = pneg %p237
        $region90: #{tpu_custom_call.1} parent=87 // pred_check_branch
          %929 = sbr.rel (%p927) target = $region92
        $region91: #{tpu_custom_call.1} parent=87 // pred_region
          %s930 = sand.u32 %s222, 1
          %s931 = scalar_lea.sflag [#allocation5], %s930
          %s932 = sand.u32 %s222, 1
          %s933 = smul.addr %s932, 8
          %s934 = scalar_lea.vmem [#allocation14], %s933
          %936 = dma.done %s931, 128
        $region92: #{tpu_custom_call.1} parent=87 // pred_fallthru
          _
        // Predicated region
        $region93: #{tpu_custom_call.1} parent=87 // pred_check
          %p937 = pneg %p263
        $region94: #{tpu_custom_call.1} parent=87 // pred_check_branch
          %939 = sbr.rel (%p937) target = $region96
        $region95: #{tpu_custom_call.1} parent=87 // pred_region
          %s940 = sand.u32 %s248, 1
          %s941 = scalar_lea.sflag [#allocation16], %s940
          %s942 = sand.u32 %s248, 1
          %s943 = smul.addr %s942, 24
          %s944 = scalar_lea.vmem [#allocation15], %s943
          %946 = dma.done %s941, 384
        $region96: #{tpu_custom_call.1} parent=87 // pred_fallthru
          _
      $region88: #{tpu_custom_call.1} parent=5 // pred_fallthru
        _
    $region6: #{tpu_custom_call.1} parent=1 // loop_footer
      %s34 = sadd.s32 1, %s30
    $region7: #{tpu_custom_call.1} parent=1 // loop_footer_branch
      %29 = sbr.rel target = $region3
    $region8: #{tpu_custom_call.1} parent=1 // loop_exit
      _
    %947 = vsyncpa [#allocation4], 1
    %s948 = scalar_lea.sflag [#allocation4], 1
    %949 = vsyncpa %s948, 1
    %950 = vsyncpa [#allocation7], 1
    %s951 = scalar_lea.sflag [#allocation7], 1
    %952 = vsyncpa %s951, 1
    %953 = vsyncpa [#allocation10], 1
    %954 = vsyncpa [#allocation13], 1
    %955 = vsyncpa [#allocation5], 1
    %s956 = scalar_lea.sflag [#allocation5], 1
    %957 = vsyncpa %s956, 1
    %958 = vsyncpa [#allocation16], 1
    %s959 = scalar_lea.sflag [#allocation16], 1
    %960 = vsyncpa %s959, 1

// kernel: tpu_custom_call.1
$region0: #{tpu_custom_call.1}
  #allocation0 [shape = 'u32[]', space=smem, size = 0x4, offset = 0x4, fixed_abs, tag = 'smem constant byte address 0x4 - core index']
  #allocation1 [shape = 'u32[72,128]{1,0:T(1,128)}', space=vmem, size = 0x9000, scoped, tag = 'internal scratch']
  #allocation2 [shape = 'f32[8,384]{1,0:T(8,128)}', space=vmem, size = 0x3000, scoped, tag = 'scratch operand']
  %s0 = inlined_call_operand.hbm [shape: f32[16,128], index: 0, kind: input, shape index: {}]
  %s1 = inlined_call_operand.hbm [shape: f32[16,384], index: 1, kind: input, shape index: {}]
  %s2 = inlined_call_operand.hbm [shape: f32[128,256], index: 2, kind: input, shape index: {}]
  %s3 = inlined_call_operand.hbm [shape: f32[128,128], index: 3, kind: input, shape index: {}]
  %s4 = inlined_call_operand.hbm [shape: f32[128,128], index: 4, kind: input, shape index: {}]
  %s5 = inlined_call_operand.vmem [shape: f32[1,128], index: 5, kind: input, shape index: {}]
  %s6 = inlined_call_operand.hbm [shape: f32[128,384], index: 6, kind: input, shape index: {}]
  %s7 = inlined_call_operand.vmem [shape: f32[1,384], index: 7, kind: input, shape index: {}]
  %s8 = inlined_call_operand.hbm [shape: f32[16,128], index: 8, kind: output, shape index: {0}]
  %s9 = inlined_call_operand.hbm [shape: f32[16,384], index: 9, kind: output, shape index: {1}]
  %10 = xla_tuple %s8, %s9
  %s11 = sld [smem:[#allocation0]]
  $region97: #{tpu_custom_call.1} parent=0
    _
  %s13 = ssub.s32 1, %s11
  %s14 = scalar_select 0, %s13, %s11
  $region1: #{tpu_custom_call.1} parent=0
    #allocation3 [shape = 'u8[8192]{0}', space=vmem, size = 0x2000, scoped, tag = 'input window, operand 0']
    #allocation4 [shape = 's32[2]{0}', space=sflag, size = 0x8, scoped, tag = 'scoped memory for tpu_custom_call.1']
    #allocation5 [shape = 's32[2]{0}', space=sflag, size = 0x8, scoped, tag = 'scoped memory for tpu_custom_call.1']
    #allocation6 [shape = 'u8[24576]{0}', space=vmem, size = 0x6000, scoped, tag = 'input window, operand 1']
    #allocation7 [shape = 's32[2]{0}', space=sflag, size = 0x8, scoped, tag = 'scoped memory for tpu_custom_call.1']
    #allocation8 [shape = 'u8[131072]{0}', space=vmem, size = 0x20000, scoped, tag = 'input window, operand 2, single buffered']
    #allocation9 [shape = 'u8[65536]{0}', space=vmem, size = 0x10000, scoped, tag = 'input window, operand 3, single buffered']
    #allocation10 [shape = 's32[1]{0}', space=sflag, size = 0x4, scoped, tag = 'scoped memory for tpu_custom_call.1']
    #allocation11 [shape = 'u8[65536]{0}', space=vmem, size = 0x10000, scoped, tag = 'input window, operand 4, single buffered']
    #allocation12 [shape = 'u8[196608]{0}', space=vmem, size = 0x30000, scoped, tag = 'input window, operand 6, single buffered']
    #allocation13 [shape = 's32[1]{0}', space=sflag, size = 0x4, scoped, tag = 'scoped memory for tpu_custom_call.1']
    #allocation14 [shape = 'u8[8192]{0}', space=vmem, size = 0x2000, scoped, tag = 'output window, operand 0']
    #allocation15 [shape = 'u8[24576]{0}', space=vmem, size = 0x6000, scoped, tag = 'output window, operand 1']
    #allocation16 [shape = 's32[2]{0}', space=sflag, size = 0x8, scoped, tag = 'scoped memory for tpu_custom_call.1']
    %15 = vsyncpa [#allocation4], 0
    %s16 = scalar_lea.sflag [#allocation4], 1
    %17 = vsyncpa %s16, 0
    %18 = vsyncpa [#allocation7], 0
    %s19 = scalar_lea.sflag [#allocation7], 1
    %20 = vsyncpa %s19, 0
    %21 = vsyncpa [#allocation10], 0
    %22 = vsyncpa [#allocation13], 0
    %23 = vsyncpa [#allocation5], 0
    %s24 = scalar_lea.sflag [#allocation5], 1
    %25 = vsyncpa %s24, 0
    %26 = vsyncpa [#allocation16], 0
    %s27 = scalar_lea.sflag [#allocation16], 1
    %28 = vsyncpa %s27, 0
    loop: start=0, step=1, limit=4
    $region2: #{tpu_custom_call.1} parent=1 // loop_pre_header
      _
    $region3: #{tpu_custom_call.1} parent=1 // loop_header
      %s30 = sphi 0, %s34
      %p31 = scmp.ge.s32.totalorder %s30, 4
      %s40 = sphi 0, %s42
      %s43 = sphi 0, %s40
      %s44 = sphi 0, %s43
      %s60 = sphi 0, %s44
      %s66 = sphi 0, %s68
      %s69 = sphi 0, %s66
      %s70 = sphi 0, %s69
      %s86 = sphi 0, %s70
      %s90 = sphi 0, %s90
      %s92 = sphi 0, %s90
      %s93 = sphi 0, %s92
      %s107 = sphi 0, %s93
      %s111 = sphi 0, %s111
      %s113 = sphi 0, %s111
      %s114 = sphi 0, %s113
      %s128 = sphi 0, %s114
      %s132 = sphi 0, %s132
      %s134 = sphi 0, %s132
      %s135 = sphi 0, %s134
      %s149 = sphi 0, %s135
      %s153 = sphi 0, %s153
      %s155 = sphi 0, %s153
      %s156 = sphi 0, %s155
      %s170 = sphi 0, %s156
      %s174 = sphi 0, %s174
      %s176 = sphi 0, %s174
      %s177 = sphi 0, %s176
      %s191 = sphi 0, %s177
      %s195 = sphi 0, %s195
      %s197 = sphi 0, %s195
      %s198 = sphi 0, %s197
      %s212 = sphi 0, %s198
      %s218 = sphi 0, %s220
      %s221 = sphi 0, %s218
      %s222 = sphi 0, %s221
      %s238 = sphi 0, %s222
      %s244 = sphi 0, %s246
      %s247 = sphi 0, %s244
      %s248 = sphi 0, %s247
      %s264 = sphi 0, %s248
    $region4: #{tpu_custom_call.1} parent=1 // loop_header_branch
      %33 = sbr.rel (%p31) target = $region8
    $region5: #{tpu_custom_call.1} parent=1 // loop_body
      %s35 = ssub.s32 %s30, 1
      %s36 = ssub.s32 %s30, 2
      %s37 = sadd.s32 %s30, 1
      %s38 = ssub.s32 %s30, %s37
      %p39 = scmp.eq.s32.totalorder %s38, 0
      %s41 = sadd.s32 %s40, 1
      %s42 = scalar_select %p39, %s40, %s41
      %p45 = pneg %p39
      %p46 = scmp.eq.s32.totalorder %s30, 1
      %p47 = por %p45, %p46
      %p48 = scmp.ne.s32.totalorder %s40, %s43
      %p49 = scmp.eq.s32.totalorder %s30, 0
      %p50 = por %p48, %p49
      %p51 = scmp.ne.s32.totalorder %s40, %s43
      %p52 = scmp.eq.s32.totalorder %s35, 1
      %p53 = por %p51, %p52
      %p54 = scmp.ne.s32.totalorder %s43, %s44
      %p55 = scmp.eq.s32.totalorder %s35, 0
      %p56 = por %p54, %p55
      %p57 = scmp.ne.s32.totalorder %s43, %s44
      %p58 = scmp.eq.s32.totalorder %s36, 1
      %p59 = por %p57, %p58
      %p61 = scmp.ne.s32.totalorder %s44, %s60
      %p62 = scmp.eq.s32.totalorder %s36, 0
      %p63 = por %p61, %p62
      %s64 = ssub.s32 %s30, %s37
      %p65 = scmp.eq.s32.totalorder %s64, 0
      %s67 = sadd.s32 %s66, 1
      %s68 = scalar_select %p65, %s66, %s67
      %p71 = pneg %p65
      %p72 = scmp.eq.s32.totalorder %s30, 1
      %p73 = por %p71, %p72
      %p74 = scmp.ne.s32.totalorder %s66, %s69
      %p75 = scmp.eq.s32.totalorder %s30, 0
      %p76 = por %p74, %p75
      %p77 = scmp.ne.s32.totalorder %s66, %s69
      %p78 = scmp.eq.s32.totalorder %s35, 1
      %p79 = por %p77, %p78
      %p80 = scmp.ne.s32.totalorder %s69, %s70
      %p81 = scmp.eq.s32.totalorder %s35, 0
      %p82 = por %p80, %p81
      %p83 = scmp.ne.s32.totalorder %s69, %s70
      %p84 = scmp.eq.s32.totalorder %s36, 1
      %p85 = por %p83, %p84
      %p87 = scmp.ne.s32.totalorder %s70, %s86
      %p88 = scmp.eq.s32.totalorder %s36, 0
      %p89 = por %p87, %p88
      %s91 = sadd.s32 %s90, 1
      %p94 = scmp.eq.s32.totalorder %s30, 1
      %p95 = scmp.ne.s32.totalorder %s90, %s92
      %p96 = scmp.eq.s32.totalorder %s30, 0
      %p97 = por %p95, %p96
      %p98 = scmp.ne.s32.totalorder %s90, %s92
      %p99 = scmp.eq.s32.totalorder %s35, 1
      %p100 = por %p98, %p99
      %p101 = scmp.ne.s32.totalorder %s92, %s93
      %p102 = scmp.eq.s32.totalorder %s35, 0
      %p103 = por %p101, %p102
      %p104 = scmp.ne.s32.totalorder %s92, %s93
      %p105 = scmp.eq.s32.totalorder %s36, 1
      %p106 = por %p104, %p105
      %p108 = scmp.ne.s32.totalorder %s93, %s107
      %p109 = scmp.eq.s32.totalorder %s36, 0
      %p110 = por %p108, %p109
      %s112 = sadd.s32 %s111, 1
      %p115 = scmp.eq.s32.totalorder %s30, 1
      %p116 = scmp.ne.s32.totalorder %s111, %s113
      %p117 = scmp.eq.s32.totalorder %s30, 0
      %p118 = por %p116, %p117
      %p119 = scmp.ne.s32.totalorder %s111, %s113
      %p120 = scmp.eq.s32.totalorder %s35, 1
      %p121 = por %p119, %p120
      %p122 = scmp.ne.s32.totalorder %s113, %s114
      %p123 = scmp.eq.s32.totalorder %s35, 0
      %p124 = por %p122, %p123
      %p125 = scmp.ne.s32.totalorder %s113, %s114
      %p126 = scmp.eq.s32.totalorder %s36, 1
      %p127 = por %p125, %p126
      %p129 = scmp.ne.s32.totalorder %s114, %s128
      %p130 = scmp.eq.s32.totalorder %s36, 0
      %p131 = por %p129, %p130
      %s133 = sadd.s32 %s132, 1
      %p136 = scmp.eq.s32.totalorder %s30, 1
      %p137 = scmp.ne.s32.totalorder %s132, %s134
      %p138 = scmp.eq.s32.totalorder %s30, 0
      %p139 = por %p137, %p138
      %p140 = scmp.ne.s32.totalorder %s132, %s134
      %p141 = scmp.eq.s32.totalorder %s35, 1
      %p142 = por %p140, %p141
      %p143 = scmp.ne.s32.totalorder %s134, %s135
      %p144 = scmp.eq.s32.totalorder %s35, 0
      %p145 = por %p143, %p144
      %p146 = scmp.ne.s32.totalorder %s134, %s135
      %p147 = scmp.eq.s32.totalorder %s36, 1
      %p148 = por %p146, %p147
      %p150 = scmp.ne.s32.totalorder %s135, %s149
      %p151 = scmp.eq.s32.totalorder %s36, 0
      %p152 = por %p150, %p151
      %s154 = sadd.s32 %s153, 1
      %p157 = scmp.eq.s32.totalorder %s30, 1
      %p158 = scmp.ne.s32.totalorder %s153, %s155
      %p159 = scmp.eq.s32.totalorder %s30, 0
      %p160 = por %p158, %p159
      %p161 = scmp.ne.s32.totalorder %s153, %s155
      %p162 = scmp.eq.s32.totalorder %s35, 1
      %p163 = por %p161, %p162
      %p164 = scmp.ne.s32.totalorder %s155, %s156
      %p165 = scmp.eq.s32.totalorder %s35, 0
      %p166 = por %p164, %p165
      %p167 = scmp.ne.s32.totalorder %s155, %s156
      %p168 = scmp.eq.s32.totalorder %s36, 1
      %p169 = por %p167, %p168
      %p171 = scmp.ne.s32.totalorder %s156, %s170
      %p172 = scmp.eq.s32.totalorder %s36, 0
      %p173 = por %p171, %p172
      %s175 = sadd.s32 %s174, 1
      %p178 = scmp.eq.s32.totalorder %s30, 1
      %p179 = scmp.ne.s32.totalorder %s174, %s176
      %p180 = scmp.eq.s32.totalorder %s30, 0
      %p181 = por %p179, %p180
      %p182 = scmp.ne.s32.totalorder %s174, %s176
      %p183 = scmp.eq.s32.totalorder %s35, 1
      %p184 = por %p182, %p183
      %p185 = scmp.ne.s32.totalorder %s176, %s177
      %p186 = scmp.eq.s32.totalorder %s35, 0
      %p187 = por %p185, %p186
      %p188 = scmp.ne.s32.totalorder %s176, %s177
      %p189 = scmp.eq.s32.totalorder %s36, 1
      %p190 = por %p188, %p189
      %p192 = scmp.ne.s32.totalorder %s177, %s191
      %p193 = scmp.eq.s32.totalorder %s36, 0
      %p194 = por %p192, %p193
      %s196 = sadd.s32 %s195, 1
      %p199 = scmp.eq.s32.totalorder %s30, 1
      %p200 = scmp.ne.s32.totalorder %s195, %s197
      %p201 = scmp.eq.s32.totalorder %s30, 0
      %p202 = por %p200, %p201
      %p203 = scmp.ne.s32.totalorder %s195, %s197
      %p204 = scmp.eq.s32.totalorder %s35, 1
      %p205 = por %p203, %p204
      %p206 = scmp.ne.s32.totalorder %s197, %s198
      %p207 = scmp.eq.s32.totalorder %s35, 0
      %p208 = por %p206, %p207
      %p209 = scmp.ne.s32.totalorder %s197, %s198
      %p210 = scmp.eq.s32.totalorder %s36, 1
      %p211 = por %p209, %p210
      %p213 = scmp.ne.s32.totalorder %s198, %s212
      %p214 = scmp.eq.s32.totalorder %s36, 0
      %p215 = por %p213, %p214
      %s216 = ssub.s32 %s30, %s37
      %p217 = scmp.eq.s32.totalorder %s216, 0
      %s219 = sadd.s32 %s218, 1
      %s220 = scalar_select %p217, %s218, %s219
      %p223 = pneg %p217
      %p224 = scmp.eq.s32.totalorder %s30, 1
      %p225 = por %p223, %p224
      %p226 = scmp.ne.s32.totalorder %s218, %s221
      %p227 = scmp.eq.s32.totalorder %s30, 0
      %p228 = por %p226, %p227
      %p229 = scmp.ne.s32.totalorder %s218, %s221
      %p230 = scmp.eq.s32.totalorder %s35, 1
      %p231 = por %p229, %p230
      %p232 = scmp.ne.s32.totalorder %s221, %s222
      %p233 = scmp.eq.s32.totalorder %s35, 0
      %p234 = por %p232, %p233
      %p235 = scmp.ne.s32.totalorder %s221, %s222
      %p236 = scmp.eq.s32.totalorder %s36, 1
      %p237 = por %p235, %p236
      %p239 = scmp.ne.s32.totalorder %s222, %s238
      %p240 = scmp.eq.s32.totalorder %s36, 0
      %p241 = por %p239, %p240
      %s242 = ssub.s32 %s30, %s37
      %p243 = scmp.eq.s32.totalorder %s242, 0
      %s245 = sadd.s32 %s244, 1
      %s246 = scalar_select %p243, %s244, %s245
      %p249 = pneg %p243
      %p250 = scmp.eq.s32.totalorder %s30, 1
      %p251 = por %p249, %p250
      %p252 = scmp.ne.s32.totalorder %s244, %s247
      %p253 = scmp.eq.s32.totalorder %s30, 0
      %p254 = por %p252, %p253
      %p255 = scmp.ne.s32.totalorder %s244, %s247
      %p256 = scmp.eq.s32.totalorder %s35, 1
      %p257 = por %p255, %p256
      %p258 = scmp.ne.s32.totalorder %s247, %s248
      %p259 = scmp.eq.s32.totalorder %s35, 0
      %p260 = por %p258, %p259
      %p261 = scmp.ne.s32.totalorder %s247, %s248
      %p262 = scmp.eq.s32.totalorder %s36, 1
      %p263 = por %p261, %p262
      %p265 = scmp.ne.s32.totalorder %s248, %s264
      %p266 = scmp.eq.s32.totalorder %s36, 0
      %p267 = por %p265, %p266
      %p268 = scmp.le.s32.totalorder 1, %s30
      %p269 = scmp.lt.s32.totalorder %s30, 3
      %p270 = pnand %p268, %p269
      %p271 = pneg %p270
      // Predicated region
      $region9: #{tpu_custom_call.1} parent=5 // pred_check
        _
      $region10: #{tpu_custom_call.1} parent=5 // pred_check_branch
        %273 = sbr.rel (%p270) target = $region12
      $region11: #{tpu_custom_call.1} parent=5 // pred_region
        %s274 = ssub.s32 %s30, 1
        // Predicated region
        $region13: #{tpu_custom_call.1} parent=11 // pred_check
          %p275 = pneg %p103
        $region14: #{tpu_custom_call.1} parent=11 // pred_check_branch
          %277 = sbr.rel (%p275) target = $region16
        $region15: #{tpu_custom_call.1} parent=11 // pred_region
          %279 = vsyncadd [#allocation7], 0
          %s280 = sshll.u32 %s2, 4
          %s281 = int_to_ptr.hbm [resolvable:$true] %s280
          %s282 = sshll.u32 [#allocation8], 4
          %s283 = int_to_ptr.vmem [resolvable:$true] %s282
          %288 = dma.hbm_to_vmem [thread:$0]  %s281, 4096, %s283, [#allocation7], 256, 256, 16
        $region16: #{tpu_custom_call.1} parent=11 // pred_fallthru
          _
        // Predicated region
        $region17: #{tpu_custom_call.1} parent=11 // pred_check
          %p289 = pneg %p124
        $region18: #{tpu_custom_call.1} parent=11 // pred_check_branch
          %291 = sbr.rel (%p289) target = $region20
        $region19: #{tpu_custom_call.1} parent=11 // pred_region
          %293 = vsyncadd [#allocation10], 0
          %s294 = sshll.u32 %s3, 4
          %s295 = int_to_ptr.hbm [resolvable:$true] %s294
          %s296 = sshll.u32 [#allocation9], 4
          %s297 = int_to_ptr.vmem [resolvable:$true] %s296
          %302 = dma.hbm_to_vmem [thread:$0]  %s295, 2048, %s297, [#allocation10], 128, 128, 8
        $region20: #{tpu_custom_call.1} parent=11 // pred_fallthru
          _
        // Predicated region
        $region21: #{tpu_custom_call.1} parent=11 // pred_check
          %p303 = pneg %p145
        $region22: #{tpu_custom_call.1} parent=11 // pred_check_branch
          %305 = sbr.rel (%p303) target = $region24
        $region23: #{tpu_custom_call.1} parent=11 // pred_region
          %307 = vsyncadd [#allocation10], 0
          %s308 = sshll.u32 %s4, 4
          %s309 = int_to_ptr.hbm [resolvable:$true] %s308
          %s310 = sshll.u32 [#allocation11], 4
          %s311 = int_to_ptr.vmem [resolvable:$true] %s310
          %316 = dma.hbm_to_vmem [thread:$0]  %s309, 2048, %s311, [#allocation10], 128, 128, 8
        $region24: #{tpu_custom_call.1} parent=11 // pred_fallthru
          _
        // Predicated region
        $region25: #{tpu_custom_call.1} parent=11 // pred_check
          %p317 = pneg %p166
        $region26: #{tpu_custom_call.1} parent=11 // pred_check_branch
          %319 = sbr.rel (%p317) target = $region28
        $region27: #{tpu_custom_call.1} parent=11 // pred_region
          _
        $region28: #{tpu_custom_call.1} parent=11 // pred_fallthru
          _
        // Predicated region
        $region29: #{tpu_custom_call.1} parent=11 // pred_check
          %p320 = pneg %p187
        $region30: #{tpu_custom_call.1} parent=11 // pred_check_branch
          %322 = sbr.rel (%p320) target = $region32
        $region31: #{tpu_custom_call.1} parent=11 // pred_region
          %324 = vsyncadd [#allocation13], 0
          %s325 = sshll.u32 %s6, 4
          %s326 = int_to_ptr.hbm [resolvable:$true] %s325
          %s327 = sshll.u32 [#allocation12], 4
          %s328 = int_to_ptr.vmem [resolvable:$true] %s327
          %333 = dma.hbm_to_vmem [thread:$0]  %s326, 6144, %s328, [#allocation13], 384, 384, 24
        $region32: #{tpu_custom_call.1} parent=11 // pred_fallthru
          _
        // Predicated region
        $region33: #{tpu_custom_call.1} parent=11 // pred_check
          %p334 = pneg %p208
        $region34: #{tpu_custom_call.1} parent=11 // pred_check_branch
          %336 = sbr.rel (%p334) target = $region36
        $region35: #{tpu_custom_call.1} parent=11 // pred_region
          _
        $region36: #{tpu_custom_call.1} parent=11 // pred_fallthru
          _
      $region12: #{tpu_custom_call.1} parent=5 // pred_fallthru
        _
      %p337 = scmp.lt.s32.totalorder %s30, 2
      // Predicated region
      $region37: #{tpu_custom_call.1} parent=5 // pred_check
        %p338 = pneg %p337
      $region38: #{tpu_custom_call.1} parent=5 // pred_check_branch
        %340 = sbr.rel (%p338) target = $region40
      $region39: #{tpu_custom_call.1} parent=5 // pred_region
        // Predicated region
        $region41: #{tpu_custom_call.1} parent=39 // pred_check
          %p341 = pneg %p50
        $region42: #{tpu_custom_call.1} parent=39 // pred_check_branch
          %343 = sbr.rel (%p341) target = $region44
        $region43: #{tpu_custom_call.1} parent=39 // pred_region
          %s344 = sand.u32 %s40, 1
          %s345 = scalar_lea.sflag [#allocation4], %s344
          %s346 = sand.u32 %s40, 1
          %s347 = smul.addr %s346, 8
          %s348 = scalar_lea.vmem [#allocation3], %s347
          %350 = vsyncadd %s345, 0
          %s351 = smul.addr %s30, 8
          %s352 = scalar_lea.hbm %s0, %s351
          %s354 = sshll.u32 %s352, 4
          %s355 = int_to_ptr.hbm [resolvable:$true] %s354
          %s356 = sshll.u32 %s348, 4
          %s357 = int_to_ptr.vmem [resolvable:$true] %s356
          %359 = dma.hbm_to_vmem [thread:$0]  %s355, 128, %s357, %s345
        $region44: #{tpu_custom_call.1} parent=39 // pred_fallthru
          _
        // Predicated region
        $region45: #{tpu_custom_call.1} parent=39 // pred_check
          %p360 = pneg %p76
        $region46: #{tpu_custom_call.1} parent=39 // pred_check_branch
          %362 = sbr.rel (%p360) target = $region48
        $region47: #{tpu_custom_call.1} parent=39 // pred_region
          %s363 = sand.u32 %s30, 1
          %s364 = scalar_lea.sflag [#allocation7], %s363
          %s365 = sand.u32 %s66, 1
          %s366 = smul.addr %s365, 24
          %s367 = scalar_lea.vmem [#allocation6], %s366
          %369 = vsyncadd %s364, 0
          %s370 = smul.addr %s30, 3
          %s371 = smul.addr %s370, 8
          %s372 = scalar_lea.hbm %s1, %s371
          %s374 = sshll.u32 %s372, 4
          %s375 = int_to_ptr.hbm [resolvable:$true] %s374
          %s376 = sshll.u32 %s367, 4
          %s377 = int_to_ptr.vmem [resolvable:$true] %s376
          %379 = dma.hbm_to_vmem [thread:$0]  %s375, 384, %s377, %s364
        $region48: #{tpu_custom_call.1} parent=39 // pred_fallthru
          _
      $region40: #{tpu_custom_call.1} parent=5 // pred_fallthru
        _
      %p380 = scmp.le.s32.totalorder 1, %s30
      %p381 = scmp.lt.s32.totalorder %s30, 3
      %p382 = pnand %p380, %p381
      %p383 = pneg %p382
      // Predicated region
      $region49: #{tpu_custom_call.1} parent=5 // pred_check
        _
      $region50: #{tpu_custom_call.1} parent=5 // pred_check_branch
        %385 = sbr.rel (%p382) target = $region52
      $region51: #{tpu_custom_call.1} parent=5 // pred_region
        %s386 = ssub.s32 %s30, 1
        %s387 = sand.u32 %s43, 1
        %s388 = scalar_lea.sflag [#allocation4], %s387
        %s389 = sand.u32 %s43, 1
        %s390 = smul.addr %s389, 8
        %s391 = scalar_lea.vmem [#allocation3], %s390
        // Predicated region
        $region53: #{tpu_custom_call.1} parent=51 // pred_check
          %p392 = pneg %p56
        $region54: #{tpu_custom_call.1} parent=51 // pred_check_branch
          %394 = sbr.rel (%p392) target = $region56
        $region55: #{tpu_custom_call.1} parent=51 // pred_region
          %396 = dma.done %s388, 128
        $region56: #{tpu_custom_call.1} parent=51 // pred_fallthru
          _
        %s397 = sand.u32 %s35, 1
        %s398 = scalar_lea.sflag [#allocation7], %s397
        %s399 = sand.u32 %s69, 1
        %s400 = smul.addr %s399, 24
        %s401 = scalar_lea.vmem [#allocation6], %s400
        // Predicated region
        $region57: #{tpu_custom_call.1} parent=51 // pred_check
          %p402 = pneg %p82
        $region58: #{tpu_custom_call.1} parent=51 // pred_check_branch
          %404 = sbr.rel (%p402) target = $region60
        $region59: #{tpu_custom_call.1} parent=51 // pred_region
          %406 = dma.done %s398, 384
        $region60: #{tpu_custom_call.1} parent=51 // pred_fallthru
          _
        // Predicated region
        $region61: #{tpu_custom_call.1} parent=51 // pred_check
          %p407 = pneg %p103
        $region62: #{tpu_custom_call.1} parent=51 // pred_check_branch
          %409 = sbr.rel (%p407) target = $region64
        $region63: #{tpu_custom_call.1} parent=51 // pred_region
          %411 = dma.done [#allocation7], 4096
        $region64: #{tpu_custom_call.1} parent=51 // pred_fallthru
          _
        // Predicated region
        $region65: #{tpu_custom_call.1} parent=51 // pred_check
          %p412 = pneg %p124
        $region66: #{tpu_custom_call.1} parent=51 // pred_check_branch
          %414 = sbr.rel (%p412) target = $region68
        $region67: #{tpu_custom_call.1} parent=51 // pred_region
          %416 = dma.done [#allocation10], 2048
        $region68: #{tpu_custom_call.1} parent=51 // pred_fallthru
          _
        // Predicated region
        $region69: #{tpu_custom_call.1} parent=51 // pred_check
          %p417 = pneg %p145
        $region70: #{tpu_custom_call.1} parent=51 // pred_check_branch
          %419 = sbr.rel (%p417) target = $region72
        $region71: #{tpu_custom_call.1} parent=51 // pred_region
          %421 = dma.done [#allocation10], 2048
        $region72: #{tpu_custom_call.1} parent=51 // pred_fallthru
          _
        // Predicated region
        $region73: #{tpu_custom_call.1} parent=51 // pred_check
          %p422 = pneg %p187
        $region74: #{tpu_custom_call.1} parent=51 // pred_check_branch
          %424 = sbr.rel (%p422) target = $region76
        $region75: #{tpu_custom_call.1} parent=51 // pred_region
          %426 = dma.done [#allocation13], 6144
        $region76: #{tpu_custom_call.1} parent=51 // pred_fallthru
          _
        %s427 = sand.u32 %s43, 1
        %s428 = scalar_lea.sflag [#allocation4], %s427
        %s429 = sand.u32 %s43, 1
        %s430 = smul.addr %s429, 8
        %s431 = scalar_lea.vmem [#allocation3], %s430
        %p432 = pneg %p56
        %p433 = pneg %p53
        %s434 = sand.u32 %s35, 1
        %s435 = scalar_lea.sflag [#allocation7], %s434
        %s436 = sand.u32 %s69, 1
        %s437 = smul.addr %s436, 24
        %s438 = scalar_lea.vmem [#allocation6], %s437
        %p439 = pneg %p82
        %p440 = pneg %p79
        %p441 = pneg %p103
        %p442 = pneg %p100
        %p443 = pneg %p124
        %p444 = pneg %p121
        %p445 = pneg %p145
        %p446 = pneg %p142
        %p447 = pneg %p166
        %p448 = pneg %p163
        %p449 = pneg %p187
        %p450 = pneg %p184
        %p451 = pneg %p208
        %p452 = pneg %p205
        %p453 = pneg %p234
        %p454 = pneg %p231
        %s455 = sand.u32 %s221, 1
        %s456 = scalar_lea.sflag [#allocation5], %s455
        %s457 = sand.u32 %s221, 1
        %s458 = smul.addr %s457, 8
        %s459 = scalar_lea.vmem [#allocation14], %s458
        %p460 = pneg %p260
        %p461 = pneg %p257
        %s462 = sand.u32 %s247, 1
        %s463 = scalar_lea.sflag [#allocation16], %s462
        %s464 = sand.u32 %s247, 1
        %s465 = smul.addr %s464, 24
        %s466 = scalar_lea.vmem [#allocation15], %s465
        %v467 = vld [vmem:[#allocation8] sm:$0xff]
        %v468 = vld [vmem:[#allocation8 + $0x8] sm:$0xff]
        %v469 = vld [vmem:[#allocation8 + $0x10] sm:$0xff]
        %v470 = vld [vmem:[#allocation8 + $0x18] sm:$0xff]
        %v471 = vld [vmem:[#allocation8 + $0x20] sm:$0xff]
        %v472 = vld [vmem:[#allocation8 + $0x28] sm:$0xff]
        %v473 = vld [vmem:[#allocation8 + $0x30] sm:$0xff]
        %v474 = vld [vmem:[#allocation8 + $0x38] sm:$0xff]
        %v475 = vld [vmem:[#allocation8 + $0x40] sm:$0xff]
        %v476 = vld [vmem:[#allocation8 + $0x48] sm:$0xff]
        %v477 = vld [vmem:[#allocation8 + $0x50] sm:$0xff]
        %v478 = vld [vmem:[#allocation8 + $0x58] sm:$0xff]
        %v479 = vld [vmem:[#allocation8 + $0x60] sm:$0xff]
        %v480 = vld [vmem:[#allocation8 + $0x68] sm:$0xff]
        %v481 = vld [vmem:[#allocation8 + $0x70] sm:$0xff]
        %v482 = vld [vmem:[#allocation8 + $0x78] sm:$0xff]
        %v483 = vld [vmem:[#allocation8 + $0x80] sm:$0xff]
        %v484 = vld [vmem:[#allocation8 + $0x88] sm:$0xff]
        %v485 = vld [vmem:[#allocation8 + $0x90] sm:$0xff]
        %v486 = vld [vmem:[#allocation8 + $0x98] sm:$0xff]
        %v487 = vld [vmem:[#allocation8 + $0xa0] sm:$0xff]
        %v488 = vld [vmem:[#allocation8 + $0xa8] sm:$0xff]
        %v489 = vld [vmem:[#allocation8 + $0xb0] sm:$0xff]
        %v490 = vld [vmem:[#allocation8 + $0xb8] sm:$0xff]
        %v491 = vld [vmem:[#allocation8 + $0xc0] sm:$0xff]
        %v492 = vld [vmem:[#allocation8 + $0xc8] sm:$0xff]
        %v493 = vld [vmem:[#allocation8 + $0xd0] sm:$0xff]
        %v494 = vld [vmem:[#allocation8 + $0xd8] sm:$0xff]
        %v495 = vld [vmem:[#allocation8 + $0xe0] sm:$0xff]
        %v496 = vld [vmem:[#allocation8 + $0xe8] sm:$0xff]
        %v497 = vld [vmem:[#allocation8 + $0xf0] sm:$0xff]
        %v498 = vld [vmem:[#allocation8 + $0xf8] sm:$0xff]
        %v499 = vld [vmem:[%s401] sm:$0xff]
        %500 = vmatpush.msra.mxu0 %v497
        %501 = vmatpush.msra.mxu0 %v495
        %502 = vmatpush.msra.mxu0 %v493
        %503 = vmatpush.msra.mxu0 %v491
        %504 = vmatpush.msra.mxu0 %v489
        %505 = vmatpush.msra.mxu0 %v487
        %506 = vmatpush.msra.mxu0 %v485
        %507 = vmatpush.msra.mxu0 %v483
        %508 = vmatpush.msra.mxu0 %v481
        %509 = vmatpush.msra.mxu0 %v479
        %510 = vmatpush.msra.mxu0 %v477
        %511 = vmatpush.msra.mxu0 %v475
        %512 = vmatpush.msra.mxu0 %v473
        %513 = vmatpush.msra.mxu0 %v471
        %514 = vmatpush.msra.mxu0 %v469
        %515 = vmatpush.msra.mxu0 %v467
        %516 = vmatmul.f32.gmra.mxu0 %v499
        %v517 = vpop.f32.mrf.mxu0
        %v518 = vadd.f32 0.0, %v517
        %519 = vdwg.mxu0
        %520 = vmatpush.msra.mxu0 %v498
        %521 = vmatpush.msra.mxu0 %v496
        %522 = vmatpush.msra.mxu0 %v494
        %523 = vmatpush.msra.mxu0 %v492
        %524 = vmatpush.msra.mxu0 %v490
        %525 = vmatpush.msra.mxu0 %v488
        %526 = vmatpush.msra.mxu0 %v486
        %527 = vmatpush.msra.mxu0 %v484
        %528 = vmatpush.msra.mxu0 %v482
        %529 = vmatpush.msra.mxu0 %v480
        %530 = vmatpush.msra.mxu0 %v478
        %531 = vmatpush.msra.mxu0 %v476
        %532 = vmatpush.msra.mxu0 %v474
        %533 = vmatpush.msra.mxu0 %v472
        %534 = vmatpush.msra.mxu0 %v470
        %535 = vmatpush.msra.mxu0 %v468
        %536 = vmatmul.f32.gmra.mxu0 %v499
        %v537 = vpop.f32.mrf.mxu0
        %v538 = vadd.f32 0.0, %v537
        %539 = vdwg.mxu0
        %540 = vst [vmem:[#allocation2] sm:$0xff] %v538
        %v541 = vmul.f32 %v518, %v518
        %v542 = vadd.f32 %v541, 0.0
        %v543 = vmul.f32 %v518, %v538
        %v544 = vadd.f32 %v543, 0.0
        %v545 = vld [vmem:[%s401 + $0x8] sm:$0xff]
        %546 = vmatpush.msra.mxu0 %v497
        %547 = vmatpush.msra.mxu0 %v495
        %548 = vmatpush.msra.mxu0 %v493
        %549 = vmatpush.msra.mxu0 %v491
        %550 = vmatpush.msra.mxu0 %v489
        %551 = vmatpush.msra.mxu0 %v487
        %552 = vmatpush.msra.mxu0 %v485
        %553 = vmatpush.msra.mxu0 %v483
        %554 = vmatpush.msra.mxu0 %v481
        %555 = vmatpush.msra.mxu0 %v479
        %556 = vmatpush.msra.mxu0 %v477
        %557 = vmatpush.msra.mxu0 %v475
        %558 = vmatpush.msra.mxu0 %v473
        %559 = vmatpush.msra.mxu0 %v471
        %560 = vmatpush.msra.mxu0 %v469
        %561 = vmatpush.msra.mxu0 %v467
        %562 = vmatmul.f32.gmra.mxu0 %v545
        %v563 = vpop.f32.mrf.mxu0
        %v564 = vadd.f32 0.0, %v563
        %565 = vdwg.mxu0
        %566 = vmatpush.msra.mxu0 %v498
        %567 = vmatpush.msra.mxu0 %v496
        %568 = vmatpush.msra.mxu0 %v494
        %569 = vmatpush.msra.mxu0 %v492
        %570 = vmatpush.msra.mxu0 %v490
        %571 = vmatpush.msra.mxu0 %v488
        %572 = vmatpush.msra.mxu0 %v486
        %573 = vmatpush.msra.mxu0 %v484
        %574 = vmatpush.msra.mxu0 %v482
        %575 = vmatpush.msra.mxu0 %v480
        %576 = vmatpush.msra.mxu0 %v478
        %577 = vmatpush.msra.mxu0 %v476
        %578 = vmatpush.msra.mxu0 %v474
        %579 = vmatpush.msra.mxu0 %v472
        %580 = vmatpush.msra.mxu0 %v470
        %581 = vmatpush.msra.mxu0 %v468
        %582 = vmatmul.f32.gmra.mxu0 %v545
        %v583 = vpop.f32.mrf.mxu0
        %v584 = vadd.f32 0.0, %v583
        %585 = vdwg.mxu0
        %586 = vst [vmem:[#allocation2 + $0x8] sm:$0xff] %v584
        %v587 = vmul.f32 %v564, %v564
        %v588 = vadd.f32 %v542, %v587
        %v589 = vmul.f32 %v564, %v584
        %v590 = vadd.f32 %v544, %v589
        %v591 = vld [vmem:[%s401 + $0x10] sm:$0xff]
        %592 = vmatpush.msra.mxu0 %v497
        %593 = vmatpush.msra.mxu0 %v495
        %594 = vmatpush.msra.mxu0 %v493
        %595 = vmatpush.msra.mxu0 %v491
        %596 = vmatpush.msra.mxu0 %v489
        %597 = vmatpush.msra.mxu0 %v487
        %598 = vmatpush.msra.mxu0 %v485
        %599 = vmatpush.msra.mxu0 %v483
        %600 = vmatpush.msra.mxu0 %v481
        %601 = vmatpush.msra.mxu0 %v479
        %602 = vmatpush.msra.mxu0 %v477
        %603 = vmatpush.msra.mxu0 %v475
        %604 = vmatpush.msra.mxu0 %v473
        %605 = vmatpush.msra.mxu0 %v471
        %606 = vmatpush.msra.mxu0 %v469
        %607 = vmatpush.msra.mxu0 %v467
        %608 = vmatmul.f32.gmra.mxu0 %v591
        %v609 = vpop.f32.mrf.mxu0
        %v610 = vadd.f32 0.0, %v609
        %611 = vdwg.mxu0
        %612 = vmatpush.msra.mxu0 %v498
        %613 = vmatpush.msra.mxu0 %v496
        %614 = vmatpush.msra.mxu0 %v494
        %615 = vmatpush.msra.mxu0 %v492
        %616 = vmatpush.msra.mxu0 %v490
        %617 = vmatpush.msra.mxu0 %v488
        %618 = vmatpush.msra.mxu0 %v486
        %619 = vmatpush.msra.mxu0 %v484
        %620 = vmatpush.msra.mxu0 %v482
        %621 = vmatpush.msra.mxu0 %v480
        %622 = vmatpush.msra.mxu0 %v478
        %623 = vmatpush.msra.mxu0 %v476
        %624 = vmatpush.msra.mxu0 %v474
        %625 = vmatpush.msra.mxu0 %v472
        %626 = vmatpush.msra.mxu0 %v470
        %627 = vmatpush.msra.mxu0 %v468
        %628 = vmatmul.f32.gmra.mxu0 %v591
        %v629 = vpop.f32.mrf.mxu0
        %v630 = vadd.f32 0.0, %v629
        %631 = vdwg.mxu0
        %632 = vst [vmem:[#allocation2 + $0x10] sm:$0xff] %v630
        %v633 = vmul.f32 %v610, %v610
        %v634 = vadd.f32 %v588, %v633
        %v635 = vmul.f32 %v610, %v630
        %v636 = vadd.f32 %v590, %v635
        %v637 = vadd.f32 %v634, 1e-08
        %v638 = vrsqrt.pop %v637
        %v639 = vmul.f32 %v638, %v637
        %v640 = vmul.f32 %v639, %v638
        %v641 = vmul.f32 0.5, %v640
        %v642 = vsub.f32 1.5, %v641
        %v643 = vmul.f32 %v638, %v642
        %v644 = vmul.f32 %v637, %v643
        %vm645 = vcmp.eq.f32.partialorder %v637, inf
        %v646 = vsel %vm645, %v637, %v644
        %vm647 = vcmp.eq.f32.partialorder %v637, 0.0
        %v648 = vand.u32 %v637, 2147483648
        %v649 = vsel %vm647, %v648, %v646
        %v650 = vld [vmem:[%s391] sm:$0xff]
        %v651 = vld [vmem:[#allocation9] sm:$0xff]
        %v652 = vld [vmem:[#allocation9 + $0x8] sm:$0xff]
        %v653 = vld [vmem:[#allocation9 + $0x10] sm:$0xff]
        %v654 = vld [vmem:[#allocation9 + $0x18] sm:$0xff]
        %v655 = vld [vmem:[#allocation9 + $0x20] sm:$0xff]
        %v656 = vld [vmem:[#allocation9 + $0x28] sm:$0xff]
        %v657 = vld [vmem:[#allocation9 + $0x30] sm:$0xff]
        %v658 = vld [vmem:[#allocation9 + $0x38] sm:$0xff]
        %v659 = vld [vmem:[#allocation9 + $0x40] sm:$0xff]
        %v660 = vld [vmem:[#allocation9 + $0x48] sm:$0xff]
        %v661 = vld [vmem:[#allocation9 + $0x50] sm:$0xff]
        %v662 = vld [vmem:[#allocation9 + $0x58] sm:$0xff]
        %v663 = vld [vmem:[#allocation9 + $0x60] sm:$0xff]
        %v664 = vld [vmem:[#allocation9 + $0x68] sm:$0xff]
        %v665 = vld [vmem:[#allocation9 + $0x70] sm:$0xff]
        %v666 = vld [vmem:[#allocation9 + $0x78] sm:$0xff]
        %v667 = vld [vmem:[#allocation11] sm:$0xff]
        %v668 = vld [vmem:[#allocation11 + $0x8] sm:$0xff]
        %v669 = vld [vmem:[#allocation11 + $0x10] sm:$0xff]
        %v670 = vld [vmem:[#allocation11 + $0x18] sm:$0xff]
        %v671 = vld [vmem:[#allocation11 + $0x20] sm:$0xff]
        %v672 = vld [vmem:[#allocation11 + $0x28] sm:$0xff]
        %v673 = vld [vmem:[#allocation11 + $0x30] sm:$0xff]
        %v674 = vld [vmem:[#allocation11 + $0x38] sm:$0xff]
        %v675 = vld [vmem:[#allocation11 + $0x40] sm:$0xff]
        %v676 = vld [vmem:[#allocation11 + $0x48] sm:$0xff]
        %v677 = vld [vmem:[#allocation11 + $0x50] sm:$0xff]
        %v678 = vld [vmem:[#allocation11 + $0x58] sm:$0xff]
        %v679 = vld [vmem:[#allocation11 + $0x60] sm:$0xff]
        %v680 = vld [vmem:[#allocation11 + $0x68] sm:$0xff]
        %v681 = vld [vmem:[#allocation11 + $0x70] sm:$0xff]
        %v682 = vld [vmem:[#allocation11 + $0x78] sm:$0xff]
        %683 = vmatpush.msra.mxu0 %v682
        %684 = vmatpush.msra.mxu0 %v681
        %685 = vmatpush.msra.mxu0 %v680
        %686 = vmatpush.msra.mxu0 %v679
        %687 = vmatpush.msra.mxu0 %v678
        %688 = vmatpush.msra.mxu0 %v677
        %689 = vmatpush.msra.mxu0 %v676
        %690 = vmatpush.msra.mxu0 %v675
        %691 = vmatpush.msra.mxu0 %v674
        %692 = vmatpush.msra.mxu0 %v673
        %693 = vmatpush.msra.mxu0 %v672
        %694 = vmatpush.msra.mxu0 %v671
        %695 = vmatpush.msra.mxu0 %v670
        %696 = vmatpush.msra.mxu0 %v669
        %697 = vmatpush.msra.mxu0 %v668
        %698 = vmatpush.msra.mxu0 %v667
        %699 = vmatmul.f32.gmra.mxu0 %v649
        %v700 = vpop.f32.mrf.mxu0
        %v701 = vadd.f32 0.0, %v700
        %702 = vdwg.mxu0
        %703 = vmatpush.msra.mxu0 %v666
        %704 = vmatpush.msra.mxu0 %v665
        %705 = vmatpush.msra.mxu0 %v664
        %706 = vmatpush.msra.mxu0 %v663
        %707 = vmatpush.msra.mxu0 %v662
        %708 = vmatpush.msra.mxu0 %v661
        %709 = vmatpush.msra.mxu0 %v660
        %710 = vmatpush.msra.mxu0 %v659
        %711 = vmatpush.msra.mxu0 %v658
        %712 = vmatpush.msra.mxu0 %v657
        %713 = vmatpush.msra.mxu0 %v656
        %714 = vmatpush.msra.mxu0 %v655
        %715 = vmatpush.msra.mxu0 %v654
        %716 = vmatpush.msra.mxu0 %v653
        %717 = vmatpush.msra.mxu0 %v652
        %718 = vmatpush.msra.mxu0 %v651
        %719 = vmatmul.f32.gmra.mxu0 %v650
        %v720 = vpop.f32.mrf.mxu0
        %v721 = vadd.f32 %v701, %v720
        %722 = vdwg.mxu0
        %v723 = vld [vmem:[%s5] sm:$0x1]
        %v725 = vperm.slane %v723, 0
        %v727 = vadd.f32 %v721, %v725
        %v728 = vxor.u32 %v727, 2147483648
        %v729 = vmul.f32 %v728, 1.442695
        %v730 = vpow.pop %v729
        %v731 = vadd.f32 %v730, 1.0
        %v732 = vrcp.pop %v731
        %v733 = vmul.f32 %v731, %v732
        %v734 = vsub.f32 1.0, %v733
        %v735 = vmul.f32 %v732, %v734
        %v736 = vadd.f32 %v732, %v735
        %vm737 = vweird.f32 %v731
        %vm738 = vweird.f32 %v732
        %vm739 = vmor %vm737, %vm738
        %v740 = vsel %vm739, %v732, %v736
        %v741 = vand.u32 2147483647, %v731
        %vm742 = vcmp.eq.f32.partialorder %v741, 8.507059e+37
        %v743 = vand.u32 %v731, 2147483648
        %v744 = vor.u32 1.1754944e-38, %v743
        %v745 = vsel %vm742, %v744, %v740
        %v746 = vmul.f32 1.0, %v745
        %v747 = vmul.f32 %v727, %v746
        %v748 = vld [vmem:[#allocation12] sm:$0xff]
        %v749 = vld [vmem:[#allocation12 + $0x8] sm:$0xff]
        %v750 = vld [vmem:[#allocation12 + $0x10] sm:$0xff]
        %v751 = vld [vmem:[#allocation12 + $0x18] sm:$0xff]
        %v752 = vld [vmem:[#allocation12 + $0x20] sm:$0xff]
        %v753 = vld [vmem:[#allocation12 + $0x28] sm:$0xff]
        %v754 = vld [vmem:[#allocation12 + $0x30] sm:$0xff]
        %v755 = vld [vmem:[#allocation12 + $0x38] sm:$0xff]
        %v756 = vld [vmem:[#allocation12 + $0x40] sm:$0xff]
        %v757 = vld [vmem:[#allocation12 + $0x48] sm:$0xff]
        %v758 = vld [vmem:[#allocation12 + $0x50] sm:$0xff]
        %v759 = vld [vmem:[#allocation12 + $0x58] sm:$0xff]
        %v760 = vld [vmem:[#allocation12 + $0x60] sm:$0xff]
        %v761 = vld [vmem:[#allocation12 + $0x68] sm:$0xff]
        %v762 = vld [vmem:[#allocation12 + $0x70] sm:$0xff]
        %v763 = vld [vmem:[#allocation12 + $0x78] sm:$0xff]
        %v764 = vld [vmem:[#allocation12 + $0x80] sm:$0xff]
        %v765 = vld [vmem:[#allocation12 + $0x88] sm:$0xff]
        %v766 = vld [vmem:[#allocation12 + $0x90] sm:$0xff]
        %v767 = vld [vmem:[#allocation12 + $0x98] sm:$0xff]
        %v768 = vld [vmem:[#allocation12 + $0xa0] sm:$0xff]
        %v769 = vld [vmem:[#allocation12 + $0xa8] sm:$0xff]
        %v770 = vld [vmem:[#allocation12 + $0xb0] sm:$0xff]
        %v771 = vld [vmem:[#allocation12 + $0xb8] sm:$0xff]
        %v772 = vld [vmem:[#allocation12 + $0xc0] sm:$0xff]
        %v773 = vld [vmem:[#allocation12 + $0xc8] sm:$0xff]
        %v774 = vld [vmem:[#allocation12 + $0xd0] sm:$0xff]
        %v775 = vld [vmem:[#allocation12 + $0xd8] sm:$0xff]
        %v776 = vld [vmem:[#allocation12 + $0xe0] sm:$0xff]
        %v777 = vld [vmem:[#allocation12 + $0xe8] sm:$0xff]
        %v778 = vld [vmem:[#allocation12 + $0xf0] sm:$0xff]
        %v779 = vld [vmem:[#allocation12 + $0xf8] sm:$0xff]
        %v780 = vld [vmem:[#allocation12 + $0x100] sm:$0xff]
        %v781 = vld [vmem:[#allocation12 + $0x108] sm:$0xff]
        %v782 = vld [vmem:[#allocation12 + $0x110] sm:$0xff]
        %v783 = vld [vmem:[#allocation12 + $0x118] sm:$0xff]
        %v784 = vld [vmem:[#allocation12 + $0x120] sm:$0xff]
        %v785 = vld [vmem:[#allocation12 + $0x128] sm:$0xff]
        %v786 = vld [vmem:[#allocation12 + $0x130] sm:$0xff]
        %v787 = vld [vmem:[#allocation12 + $0x138] sm:$0xff]
        %v788 = vld [vmem:[#allocation12 + $0x140] sm:$0xff]
        %v789 = vld [vmem:[#allocation12 + $0x148] sm:$0xff]
        %v790 = vld [vmem:[#allocation12 + $0x150] sm:$0xff]
        %v791 = vld [vmem:[#allocation12 + $0x158] sm:$0xff]
        %v792 = vld [vmem:[#allocation12 + $0x160] sm:$0xff]
        %v793 = vld [vmem:[#allocation12 + $0x168] sm:$0xff]
        %v794 = vld [vmem:[#allocation12 + $0x170] sm:$0xff]
        %v795 = vld [vmem:[#allocation12 + $0x178] sm:$0xff]
        %v796 = vld [vmem:[%s7] sm:$0x7]
        %v798 = vperm.slane %v796, 0
        %v799 = vperm.slane %v796, 1
        %v800 = vperm.slane %v796, 2
        %804 = vmatpush.msra.mxu0 %v793
        %805 = vmatpush.msra.mxu0 %v790
        %806 = vmatpush.msra.mxu0 %v787
        %807 = vmatpush.msra.mxu0 %v784
        %808 = vmatpush.msra.mxu0 %v781
        %809 = vmatpush.msra.mxu0 %v778
        %810 = vmatpush.msra.mxu0 %v775
        %811 = vmatpush.msra.mxu0 %v772
        %812 = vmatpush.msra.mxu0 %v769
        %813 = vmatpush.msra.mxu0 %v766
        %814 = vmatpush.msra.mxu0 %v763
        %815 = vmatpush.msra.mxu0 %v760
        %816 = vmatpush.msra.mxu0 %v757
        %817 = vmatpush.msra.mxu0 %v754
        %818 = vmatpush.msra.mxu0 %v751
        %819 = vmatpush.msra.mxu0 %v748
        %820 = vmatmul.f32.gmra.mxu0 %v747
        %v821 = vpop.f32.mrf.mxu0
        %v822 = vadd.f32 %v798, %v821
        %823 = vdwg.mxu0
        %824 = vmatpush.msra.mxu0 %v794
        %825 = vmatpush.msra.mxu0 %v791
        %826 = vmatpush.msra.mxu0 %v788
        %827 = vmatpush.msra.mxu0 %v785
        %828 = vmatpush.msra.mxu0 %v782
        %829 = vmatpush.msra.mxu0 %v779
        %830 = vmatpush.msra.mxu0 %v776
        %831 = vmatpush.msra.mxu0 %v773
        %832 = vmatpush.msra.mxu0 %v770
        %833 = vmatpush.msra.mxu0 %v767
        %834 = vmatpush.msra.mxu0 %v764
        %835 = vmatpush.msra.mxu0 %v761
        %836 = vmatpush.msra.mxu0 %v758
        %837 = vmatpush.msra.mxu0 %v755
        %838 = vmatpush.msra.mxu0 %v752
        %839 = vmatpush.msra.mxu0 %v749
        %840 = vmatmul.f32.gmra.mxu0 %v747
        %v841 = vpop.f32.mrf.mxu0
        %v842 = vadd.f32 %v799, %v841
        %843 = vdwg.mxu0
        %844 = vmatpush.msra.mxu0 %v795
        %845 = vmatpush.msra.mxu0 %v792
        %846 = vmatpush.msra.mxu0 %v789
        %847 = vmatpush.msra.mxu0 %v786
        %848 = vmatpush.msra.mxu0 %v783
        %849 = vmatpush.msra.mxu0 %v780
        %850 = vmatpush.msra.mxu0 %v777
        %851 = vmatpush.msra.mxu0 %v774
        %852 = vmatpush.msra.mxu0 %v771
        %853 = vmatpush.msra.mxu0 %v768
        %854 = vmatpush.msra.mxu0 %v765
        %855 = vmatpush.msra.mxu0 %v762
        %856 = vmatpush.msra.mxu0 %v759
        %857 = vmatpush.msra.mxu0 %v756
        %858 = vmatpush.msra.mxu0 %v753
        %859 = vmatpush.msra.mxu0 %v750
        %860 = vmatmul.f32.gmra.mxu0 %v747
        %v861 = vpop.f32.mrf.mxu0
        %v862 = vadd.f32 %v800, %v861
        %863 = vdwg.mxu0
        %v864 = vadd.f32 %v650, %v822
        %v865 = vmul.f32 %v862, %v636
        %v866 = vadd.f32 %v864, %v865
        %867 = vst [vmem:[%s459] sm:$0xff] %v866
        %v868 = vld [vmem:[#allocation2] sm:$0xff]
        %v869 = vmul.f32 %v842, %v868
        %v870 = vld [vmem:[%s401] sm:$0xff]
        %v871 = vadd.f32 %v870, %v869
        %872 = vst [vmem:[%s466] sm:$0xff] %v871
        %v873 = vld [vmem:[#allocation2 + $0x8] sm:$0xff]
        %v874 = vmul.f32 %v842, %v873
        %v875 = vld [vmem:[%s401 + $0x8] sm:$0xff]
        %v876 = vadd.f32 %v875, %v874
        %877 = vst [vmem:[%s466 + $0x8] sm:$0xff] %v876
        %v878 = vld [vmem:[#allocation2 + $0x10] sm:$0xff]
        %v879 = vmul.f32 %v842, %v878
        %v880 = vld [vmem:[%s401 + $0x10] sm:$0xff]
        %v881 = vadd.f32 %v880, %v879
        %882 = vst [vmem:[%s466 + $0x10] sm:$0xff] %v881
        %s883 = sand.u32 %s221, 1
        %s884 = scalar_lea.sflag [#allocation5], %s883
        %s885 = sand.u32 %s221, 1
        %s886 = smul.addr %s885, 8
        %s887 = scalar_lea.vmem [#allocation14], %s886
        %s888 = sand.u32 %s247, 1
        %s889 = scalar_lea.sflag [#allocation16], %s888
        %s890 = sand.u32 %s247, 1
        %s891 = smul.addr %s890, 24
        %s892 = scalar_lea.vmem [#allocation15], %s891
        // Predicated region
        $region77: #{tpu_custom_call.1} parent=51 // pred_check
          %p893 = pneg %p231
        $region78: #{tpu_custom_call.1} parent=51 // pred_check_branch
          %895 = sbr.rel (%p893) target = $region80
        $region79: #{tpu_custom_call.1} parent=51 // pred_region
          %897 = vsyncadd %s884, 0
          %s898 = smul.addr %s35, 8
          %s899 = scalar_lea.hbm %s8, %s898
          %s901 = sshll.u32 %s887, 4
          %s902 = int_to_ptr.vmem [resolvable:$true] %s901
          %s903 = sshll.u32 %s899, 4
          %s904 = int_to_ptr.hbm [resolvable:$true] %s903
          %906 = dma.vmem_to_hbm [thread:$0]  %s902, 128, %s904, %s884
        $region80: #{tpu_custom_call.1} parent=51 // pred_fallthru
          _
        // Predicated region
        $region81: #{tpu_custom_call.1} parent=51 // pred_check
          %p907 = pneg %p257
        $region82: #{tpu_custom_call.1} parent=51 // pred_check_branch
          %909 = sbr.rel (%p907) target = $region84
        $region83: #{tpu_custom_call.1} parent=51 // pred_region
          %911 = vsyncadd %s889, 0
          %s912 = smul.addr %s35, 3
          %s913 = smul.addr %s912, 8
          %s914 = scalar_lea.hbm %s9, %s913
          %s916 = sshll.u32 %s892, 4
          %s917 = int_to_ptr.vmem [resolvable:$true] %s916
          %s918 = sshll.u32 %s914, 4
          %s919 = int_to_ptr.hbm [resolvable:$true] %s918
          %921 = dma.vmem_to_hbm [thread:$0]  %s917, 384, %s919, %s889
        $region84: #{tpu_custom_call.1} parent=51 // pred_fallthru
          _
      $region52: #{tpu_custom_call.1} parent=5 // pred_fallthru
        _
      %p922 = scmp.le.s32.totalorder 2, %s30
      // Predicated region
      $region85: #{tpu_custom_call.1} parent=5 // pred_check
        %p923 = pneg %p922
      $region86: #{tpu_custom_call.1} parent=5 // pred_check_branch
        %925 = sbr.rel (%p923) target = $region88
      $region87: #{tpu_custom_call.1} parent=5 // pred_region
        %s926 = ssub.s32 %s30, 2
        // Predicated region
        $region89: #{tpu_custom_call.1} parent=87 // pred_check
          %p927 = pneg %p237
        $region90: #{tpu_custom_call.1} parent=87 // pred_check_branch
          %929 = sbr.rel (%p927) target = $region92
        $region91: #{tpu_custom_call.1} parent=87 // pred_region
          %s930 = sand.u32 %s222, 1
          %s931 = scalar_lea.sflag [#allocation5], %s930
          %s932 = sand.u32 %s222, 1
          %s933 = smul.addr %s932, 8
          %s934 = scalar_lea.vmem [#allocation14], %s933
          %936 = dma.done %s931, 128
        $region92: #{tpu_custom_call.1} parent=87 // pred_fallthru
          _
        // Predicated region
        $region93: #{tpu_custom_call.1} parent=87 // pred_check
          %p937 = pneg %p263
        $region94: #{tpu_custom_call.1} parent=87 // pred_check_branch
          %939 = sbr.rel (%p937) target = $region96
        $region95: #{tpu_custom_call.1} parent=87 // pred_region
          %s940 = sand.u32 %s248, 1
          %s941 = scalar_lea.sflag [#allocation16], %s940
          %s942 = sand.u32 %s248, 1
          %s943 = smul.addr %s942, 24
          %s944 = scalar_lea.vmem [#allocation15], %s943
          %946 = dma.done %s941, 384
        $region96: #{tpu_custom_call.1} parent=87 // pred_fallthru
          _
      $region88: #{tpu_custom_call.1} parent=5 // pred_fallthru
        _
    $region6: #{tpu_custom_call.1} parent=1 // loop_footer
      %s34 = sadd.s32 1, %s30
    $region7: #{tpu_custom_call.1} parent=1 // loop_footer_branch
      %29 = sbr.rel target = $region3
    $region8: #{tpu_custom_call.1} parent=1 // loop_exit
      _
    %947 = vsyncpa [#allocation4], 1
    %s948 = scalar_lea.sflag [#allocation4], 1
    %949 = vsyncpa %s948, 1
    %950 = vsyncpa [#allocation7], 1
    %s951 = scalar_lea.sflag [#allocation7], 1
    %952 = vsyncpa %s951, 1
    %953 = vsyncpa [#allocation10], 1
    %954 = vsyncpa [#allocation13], 1
    %955 = vsyncpa [#allocation5], 1
    %s956 = scalar_lea.sflag [#allocation5], 1
    %957 = vsyncpa %s956, 1
    %958 = vsyncpa [#allocation16], 1
    %s959 = scalar_lea.sflag [#allocation16], 1
    %960 = vsyncpa %s959, 1

</llo_original>
